<compile_context>
chip_gen: v7x
topology: tpu7x:2x2x1
jax: 0.10.0
libtpu: 0.0.40
codegen_flags: <defaults>
</compile_context>

<pallas_src>
import functools
import math

import jax
import jax.numpy as jnp
import numpy as np
from jax.experimental import pallas as pl
from jax.experimental.pallas import tpu as pltpu


def _round_up(a, b):
    return (a + b - 1) // b * b


def _tpu_vmem_capacity_bytes():
    try:
        return int(pltpu.get_tpu_info().vmem_capacity_bytes)
    except Exception:
        return 0   # unknown -> conservative (v7x-sized) defaults


def _process_en_kernel(xm_ref, xh_ref, w_ref, b_ref, o_ref, *,
                       s, r_main, wq_pad, wp, tile_hp, cin_pad, cout_pad):
    """One (batch sample, pooled-row tile) grid step.

    xm_ref: (s, r_main, wq_pad, cin_pad)   main rows, W pre-split by pooling phase (phase major)
    xh_ref: (s, 2, wq_pad, cin_pad)        2 conv-halo rows past the tile
    w_ref:  (3, 3*cin_pad, cout_pad)       per column tap kj: row taps stacked along K, BN folded
    b_ref:  (1, cout_pad)                  folded bias (conv bias + BN shift)
    o_ref:  (tile_hp, wp, cout_pad)        pooled output tile (lane-dense C_out)
    """
    m_rows = r_main * wq_pad
    bias = b_ref[...].reshape(1, 1, cout_pad)
    wk = [w_ref[kj] for kj in range(3)]                               # (3*cin_pad, cout_pad)

    # Per input W-phase LHS with the 3 conv row taps folded into the contraction dim:
    #   lhs[b][r*wq_pad + pw, ki*cin_pad + c] = x_phase_b[r + ki, pw, c]
    # Boundary rows come straight from the 2-row halo ref (no whole-tile concat).
    lhs = []
    for b in range(s):
        ext = jnp.concatenate([xm_ref[b], xh_ref[b]], axis=0)        # (r_main + 2, wq, cin)
        taps = [ext[ki:ki + r_main].reshape(m_rows, cin_pad) for ki in range(3)]
        lhs.append(jnp.concatenate(taps, axis=-1))                   # (m_rows, 3*cin_pad)

    # TODO(synk): for large pooling scales (s >= 4) this unrolled phase loop should become a
    # lax.fori_loop over a VMEM-stacked lhs to bound vreg pressure.
    out = None
    for dj in range(s):                          # output pooling phase along W
        accs = {}                                # pooled-column tap offset o -> 2D f32 acc
        for kj in range(3):                      # conv column tap
            b = (dj + kj) % s                    # input W-phase feeding this tap
            o = (dj + kj) // s                   # pooled-column offset of this tap
            p = jnp.dot(lhs[b], wk[kj], preferred_element_type=jnp.float32)
            accs[o] = p if o not in accs else accs[o] + p            # back-to-back dot+acc
        acc = None                               # combine offset groups once per phase
        for o, a in accs.items():
            a = a.reshape(r_main, wq_pad, cout_pad)[:, o:o + wp, :]
            acc = a if acc is None else acc + a
        y = jnp.maximum(acc + bias, 0.0)                             # folded BN/bias + ReLU
        y = jnp.max(y.reshape(tile_hp, s, wp, cout_pad), axis=1)     # MaxPool along H
        out = y if out is None else jnp.maximum(out, y)              # MaxPool along W (phases)
    o_ref[...] = out.astype(o_ref.dtype)


def process_en_forward(x, conv_w, conv_b, gamma, beta, run_mean, run_var, *,
                       scale, eps=1e-5, matmul_dtype=jnp.bfloat16, target_conv_rows=None):
    """x: (N, C_in, H, W) float32 (NCHW, like PyTorch). Returns (N, C_out, H_pool, W_pool).

    matmul_dtype=bf16 (default, recommended on all generations; MXU-native, f32 accumulation,
    ~bf16-level error vs the f32 reference) or float32 for an exact path.
    """
    n, c_in, h, w = x.shape
    c_out = conv_w.shape[0]
    s = int(scale)
    h_out, w_out = h - 2, w - 2                  # Conv2d(3, stride=1, padding=0)
    hp, wp = h_out // s, w_out // s              # MaxPool2d(scale) floors
    assert hp > 0 and wp > 0, "input too small for conv+pool"

    sub = 8 * (4 // jnp.dtype(matmul_dtype).itemsize)    # 8 (f32) / 16 (bf16)
    cin_pad = _round_up(c_in, sub)
    cout_pad = _round_up(c_out, 128)                     # lane-dense output stores
    o_max = (s + 1) // s                                 # max pooled-column tap offset
    wq_pad = _round_up(wp + o_max, 8)

    # Generation-aware tiling / VMEM budget (v5e/v6e: 128 MiB VMEM, v7x: 64 MiB per TC).
    big_vmem = _tpu_vmem_capacity_bytes() >= 96 * 1024 * 1024
    if target_conv_rows is None:
        target_conv_rows = 64 if big_vmem else 32
    vmem_limit = (64 if big_vmem else 40) * 1024 * 1024

    # pooled-row tile: ~target_conv_rows conv rows per step, with tile_hp*s a multiple of 8
    q = 8 // math.gcd(s, 8)
    tile_hp = max(q, (target_conv_rows // (q * s)) * q)
    tile_hp = min(tile_hp, _round_up(hp, q))
    hp_pad = _round_up(hp, tile_hp)
    r_main = tile_hp * s                                 # conv rows per tile (multiple of 8)
    n_tiles = hp_pad // tile_hp

    halo_rows = 2                                        # 3x3 conv needs +2 rows past the tile
    halo_idx = r_main // halo_rows
    h_slab = hp_pad * s + halo_rows
    w_slab = wq_pad * s

    # ---- glue: one pad + one transpose (NCHW -> phase-major NHWC), fused downcast ----
    x_c = x[:, :, :min(h, h_slab), :min(w, w_slab)]
    x_p = jnp.pad(x_c, ((0, 0), (0, cin_pad - c_in),
                        (0, h_slab - x_c.shape[2]), (0, w_slab - x_c.shape[3])))
    x_s = jnp.transpose(x_p.reshape(n, cin_pad, h_slab, wq_pad, s),
                        (0, 4, 2, 3, 1)).astype(matmul_dtype)        # (N, s, H_slab, Wq, Cin)

    # Fold conv bias + eval-mode BatchNorm into weights / one per-channel bias, and stack the
    # 3 row taps along the contraction dim: w_k[kj, ki*cin_pad + ci, co].
    # TODO(synk): PyTorch default Module state is training-mode BN (batch statistics);
    # eval-mode running statistics are folded in here.
    bn_scale = gamma / jnp.sqrt(run_var + eps)
    w_kkic = jnp.transpose(conv_w * bn_scale[:, None, None, None], (3, 2, 1, 0))  # (kj,ki,ci,co)
    w_kkic = jnp.pad(w_kkic, ((0, 0), (0, 0), (0, cin_pad - c_in), (0, cout_pad - c_out)))
    w_k = w_kkic.reshape(3, 3 * cin_pad, cout_pad).astype(matmul_dtype)
    bias = beta + (conv_b - run_mean) * bn_scale
    bias = jnp.pad(bias, (0, cout_pad - c_out)).reshape(1, cout_pad).astype(jnp.float32)

    kernel = functools.partial(_process_en_kernel, s=s, r_main=r_main, wq_pad=wq_pad,
                               wp=wp, tile_hp=tile_hp, cin_pad=cin_pad, cout_pad=cout_pad)

    out = pl.pallas_call(
        kernel,
        out_shape=jax.ShapeDtypeStruct((n, hp_pad, wp, cout_pad), jnp.float32),
        grid=(n, n_tiles),
        in_specs=[
            pl.BlockSpec((None, s, r_main, wq_pad, cin_pad),
                         lambda bi, t: (bi, 0, t, 0, 0)),
            pl.BlockSpec((None, s, halo_rows, wq_pad, cin_pad),
                         lambda bi, t: (bi, 0, (t + 1) * halo_idx, 0, 0)),    # 2 halo rows
            # Weights / bias are grid-invariant (constant index map), so the pipeline only DMAs
            # them once; pl.Buffered(1) could also halve their VMEM footprint on v7x.
            pl.BlockSpec((3, 3 * cin_pad, cout_pad), lambda bi, t: (0, 0, 0)),
            pl.BlockSpec((1, cout_pad), lambda bi, t: (0, 0)),
        ],
        out_specs=pl.BlockSpec((None, tile_hp, wp, cout_pad), lambda bi, t: (bi, t, 0, 0)),
        compiler_params=pltpu.CompilerParams(
            dimension_semantics=("parallel", "parallel"),
            vmem_limit_bytes=vmem_limit),
    )(x_s, x_s, w_k, bias)

    out = out[:, :hp, :, :c_out]                 # crop padded pooled rows / padded channels
    return jnp.transpose(out, (0, 3, 1, 2))      # back to NCHW


def _reference(x, conv_w, conv_b, gamma, beta, run_mean, run_var, scale, eps=1e-5):
    y = jax.lax.conv_general_dilated(
        x, conv_w, window_strides=(1, 1), padding="VALID",
        dimension_numbers=("NCHW", "OIHW", "NCHW"))
    y = y + conv_b[None, :, None, None]
    y = (y - run_mean[None, :, None, None]) / jnp.sqrt(run_var[None, :, None, None] + eps)
    y = y * gamma[None, :, None, None] + beta[None, :, None, None]
    y = jnp.maximum(y, 0.0)
    y = jax.lax.reduce_window(y, -jnp.inf, jax.lax.max,
                              (1, 1, scale, scale), (1, 1, scale, scale), "VALID")
    return y


if __name__ == "__main__":
    key = jax.random.PRNGKey(0)
    n, c_in, c_out, h, w_sp, scale = 2, 4, 8, 16, 16, 2
    ks = jax.random.split(key, 7)
    x = jax.random.normal(ks[0], (n, c_in, h, w_sp), jnp.float32)
    conv_w = jax.random.normal(ks[1], (c_out, c_in, 3, 3), jnp.float32) * 0.1
    conv_b = jax.random.normal(ks[2], (c_out,), jnp.float32) * 0.1
    gamma = jax.random.uniform(ks[3], (c_out,), jnp.float32, 0.5, 1.5)
    beta = jax.random.normal(ks[4], (c_out,), jnp.float32) * 0.1
    run_mean = jax.random.normal(ks[5], (c_out,), jnp.float32) * 0.1
    run_var = jax.random.uniform(ks[6], (c_out,), jnp.float32, 0.5, 1.5)

    ref = _reference(x, conv_w, conv_b, gamma, beta, run_mean, run_var, scale)

    # exact f32 matmul path: tight correctness check
    out_f32 = process_en_forward(x, conv_w, conv_b, gamma, beta, run_mean, run_var,
                                 scale=scale, matmul_dtype=jnp.float32)
    out_f32 = jax.block_until_ready(out_f32)
    assert out_f32.shape == ref.shape, (out_f32.shape, ref.shape)
    np.testing.assert_allclose(np.asarray(out_f32), np.asarray(ref), rtol=1e-4, atol=1e-4)

    # bf16 matmul path (default on all generations): f32 accumulation, bf16-level tolerance
    out_bf16 = process_en_forward(x, conv_w, conv_b, gamma, beta, run_mean, run_var,
                                  scale=scale, matmul_dtype=jnp.bfloat16)
    out_bf16 = jax.block_until_ready(out_bf16)
    assert out_bf16.shape == ref.shape, (out_bf16.shape, ref.shape)
    np.testing.assert_allclose(np.asarray(out_bf16), np.asarray(ref), rtol=1e-1, atol=1e-1)

    print("KERNEL_OK")
</pallas_src>

<mosaic_0001>
module attributes {stable_mosaic.version = 11 : i64} {
  func.func @_process_en_kernel(%arg0: i32, %arg1: i32, %arg2: memref<1x2x16x8x8xf32, #tpu.memory_space<vmem>>, %arg3: memref<1x2x2x8x8xf32, #tpu.memory_space<vmem>>, %arg4: memref<3x24x128xf32, #tpu.memory_space<vmem>>, %arg5: memref<1x128xf32, #tpu.memory_space<vmem>>, %arg6: memref<1x8x7x128xf32, #tpu.memory_space<vmem>>) attributes {dimension_semantics = [#tpu.dimension_semantics<parallel>, #tpu.dimension_semantics<parallel>], iteration_bounds = array<i64: 2, 1>, scalar_prefetch = 0 : i64, scratch_operands = 0 : i64, tpu.core_type = #tpu.core_type<tc>, window_params = [{transform_indices = @transform_0, window_bounds = array<i64: 1, 2, 16, 8, 8>}, {transform_indices = @transform_1, window_bounds = array<i64: 1, 2, 2, 8, 8>}, {pipeline_mode = #tpu.pipeline_mode<synchronous>, transform_indices = @transform_2, window_bounds = array<i64: 3, 24, 128>}, {pipeline_mode = #tpu.pipeline_mode<synchronous>, transform_indices = @transform_3, window_bounds = array<i64: 1, 128>}, {transform_indices = @transform_4, window_bounds = array<i64: 1, 8, 7, 128>}]} {
    %c0 = arith.constant 0 : index
    %c0_0 = arith.constant 0 : index
    %0 = vector.load %arg5[%c0, %c0_0] : memref<1x128xf32, #tpu.memory_space<vmem>>, vector<1x128xf32>
    %1 = vector.shape_cast %0 : vector<1x128xf32> to vector<1x1x128xf32>
    %c0_1 = arith.constant 0 : index
    %c0_2 = arith.constant 0 : index
    %c0_3 = arith.constant 0 : index
    %2 = vector.load %arg4[%c0_1, %c0_2, %c0_3] : memref<3x24x128xf32, #tpu.memory_space<vmem>>, vector<1x24x128xf32>
    %3 = vector.shape_cast %2 : vector<1x24x128xf32> to vector<24x128xf32>
    %c1 = arith.constant 1 : index
    %c0_4 = arith.constant 0 : index
    %c0_5 = arith.constant 0 : index
    %4 = vector.load %arg4[%c1, %c0_4, %c0_5] : memref<3x24x128xf32, #tpu.memory_space<vmem>>, vector<1x24x128xf32>
    %5 = vector.shape_cast %4 : vector<1x24x128xf32> to vector<24x128xf32>
    %c2 = arith.constant 2 : index
    %c0_6 = arith.constant 0 : index
    %c0_7 = arith.constant 0 : index
    %6 = vector.load %arg4[%c2, %c0_6, %c0_7] : memref<3x24x128xf32, #tpu.memory_space<vmem>>, vector<1x24x128xf32>
    %7 = vector.shape_cast %6 : vector<1x24x128xf32> to vector<24x128xf32>
    %c0_8 = arith.constant 0 : index
    %c0_9 = arith.constant 0 : index
    %c0_10 = arith.constant 0 : index
    %c0_11 = arith.constant 0 : index
    %c0_12 = arith.constant 0 : index
    %8 = vector.load %arg2[%c0_8, %c0_9, %c0_10, %c0_11, %c0_12] : memref<1x2x16x8x8xf32, #tpu.memory_space<vmem>>, vector<1x1x16x8x8xf32>
    %9 = vector.shape_cast %8 : vector<1x1x16x8x8xf32> to vector<16x8x8xf32>
    %c0_13 = arith.constant 0 : index
    %c0_14 = arith.constant 0 : index
    %c0_15 = arith.constant 0 : index
    %c0_16 = arith.constant 0 : index
    %c0_17 = arith.constant 0 : index
    %10 = vector.load %arg3[%c0_13, %c0_14, %c0_15, %c0_16, %c0_17] : memref<1x2x2x8x8xf32, #tpu.memory_space<vmem>>, vector<1x1x2x8x8xf32>
    %11 = vector.shape_cast %10 : vector<1x1x2x8x8xf32> to vector<2x8x8xf32>
    %12 = tpu.concatenate %9, %11 in 0 : vector<16x8x8xf32>, vector<2x8x8xf32> -> vector<18x8x8xf32>
    %13 = vector.extract_strided_slice %12 {offsets = [0, 0, 0], sizes = [16, 8, 8], strides = [1, 1, 1]} : vector<18x8x8xf32> to vector<16x8x8xf32>
    %14 = vector.shape_cast %13 : vector<16x8x8xf32> to vector<128x8xf32>
    %15 = vector.extract_strided_slice %12 {offsets = [1, 0, 0], sizes = [16, 8, 8], strides = [1, 1, 1]} : vector<18x8x8xf32> to vector<16x8x8xf32>
    %16 = vector.shape_cast %15 : vector<16x8x8xf32> to vector<128x8xf32>
    %17 = vector.extract_strided_slice %12 {offsets = [2, 0, 0], sizes = [16, 8, 8], strides = [1, 1, 1]} : vector<18x8x8xf32> to vector<16x8x8xf32>
    %18 = vector.shape_cast %17 : vector<16x8x8xf32> to vector<128x8xf32>
    %19 = tpu.concatenate %14, %16, %18 in 1 : vector<128x8xf32>, vector<128x8xf32>, vector<128x8xf32> -> vector<128x24xf32>
    %c0_18 = arith.constant 0 : index
    %c1_19 = arith.constant 1 : index
    %c0_20 = arith.constant 0 : index
    %c0_21 = arith.constant 0 : index
    %c0_22 = arith.constant 0 : index
    %20 = vector.load %arg2[%c0_18, %c1_19, %c0_20, %c0_21, %c0_22] : memref<1x2x16x8x8xf32, #tpu.memory_space<vmem>>, vector<1x1x16x8x8xf32>
    %21 = vector.shape_cast %20 : vector<1x1x16x8x8xf32> to vector<16x8x8xf32>
    %c0_23 = arith.constant 0 : index
    %c1_24 = arith.constant 1 : index
    %c0_25 = arith.constant 0 : index
    %c0_26 = arith.constant 0 : index
    %c0_27 = arith.constant 0 : index
    %22 = vector.load %arg3[%c0_23, %c1_24, %c0_25, %c0_26, %c0_27] : memref<1x2x2x8x8xf32, #tpu.memory_space<vmem>>, vector<1x1x2x8x8xf32>
    %23 = vector.shape_cast %22 : vector<1x1x2x8x8xf32> to vector<2x8x8xf32>
    %24 = tpu.concatenate %21, %23 in 0 : vector<16x8x8xf32>, vector<2x8x8xf32> -> vector<18x8x8xf32>
    %25 = vector.extract_strided_slice %24 {offsets = [0, 0, 0], sizes = [16, 8, 8], strides = [1, 1, 1]} : vector<18x8x8xf32> to vector<16x8x8xf32>
    %26 = vector.shape_cast %25 : vector<16x8x8xf32> to vector<128x8xf32>
    %27 = vector.extract_strided_slice %24 {offsets = [1, 0, 0], sizes = [16, 8, 8], strides = [1, 1, 1]} : vector<18x8x8xf32> to vector<16x8x8xf32>
    %28 = vector.shape_cast %27 : vector<16x8x8xf32> to vector<128x8xf32>
    %29 = vector.extract_strided_slice %24 {offsets = [2, 0, 0], sizes = [16, 8, 8], strides = [1, 1, 1]} : vector<18x8x8xf32> to vector<16x8x8xf32>
    %30 = vector.shape_cast %29 : vector<16x8x8xf32> to vector<128x8xf32>
    %31 = tpu.concatenate %26, %28, %30 in 1 : vector<128x8xf32>, vector<128x8xf32>, vector<128x8xf32> -> vector<128x24xf32>
    %cst = arith.constant dense<0.000000e+00> : vector<128x128xf32>
    %32 = tpu.matmul %19, %3, %cst {dimension_numbers = #tpu.dot_dimension_numbers<[1], [0], [0], [1], [0, 0, 1, 1], [], []>} : vector<128x24xf32>, vector<24x128xf32>, vector<128x128xf32> -> vector<128x128xf32>
    %cst_28 = arith.constant dense<0.000000e+00> : vector<128x128xf32>
    %33 = tpu.matmul %31, %5, %cst_28 {dimension_numbers = #tpu.dot_dimension_numbers<[1], [0], [0], [1], [0, 0, 1, 1], [], []>} : vector<128x24xf32>, vector<24x128xf32>, vector<128x128xf32> -> vector<128x128xf32>
    %34 = arith.addf %32, %33 : vector<128x128xf32>
    %cst_29 = arith.constant dense<0.000000e+00> : vector<128x128xf32>
    %35 = tpu.matmul %19, %7, %cst_29 {dimension_numbers = #tpu.dot_dimension_numbers<[1], [0], [0], [1], [0, 0, 1, 1], [], []>} : vector<128x24xf32>, vector<24x128xf32>, vector<128x128xf32> -> vector<128x128xf32>
    %36 = vector.shape_cast %34 : vector<128x128xf32> to vector<16x8x128xf32>
    %37 = vector.extract_strided_slice %36 {offsets = [0, 0, 0], sizes = [16, 7, 128], strides = [1, 1, 1]} : vector<16x8x128xf32> to vector<16x7x128xf32>
    %38 = vector.shape_cast %35 : vector<128x128xf32> to vector<16x8x128xf32>
    %39 = vector.extract_strided_slice %38 {offsets = [0, 1, 0], sizes = [16, 7, 128], strides = [1, 1, 1]} : vector<16x8x128xf32> to vector<16x7x128xf32>
    %40 = arith.addf %37, %39 : vector<16x7x128xf32>
    %41 = vector.broadcast %1 : vector<1x1x128xf32> to vector<16x7x128xf32>
    %42 = arith.addf %40, %41 : vector<16x7x128xf32>
    %cst_30 = arith.constant 0.000000e+00 : f32
    %43 = vector.broadcast %cst_30 : f32 to vector<16x7x128xf32>
    %44 = arith.maximumf %42, %43 : vector<16x7x128xf32>
    %45 = vector.shape_cast %44 : vector<16x7x128xf32> to vector<8x2x7x128xf32>
    %cst_31 = arith.constant dense<0xFF800000> : vector<8x7x128xf32>
    %46 = vector.multi_reduction <maximumf>, %45, %cst_31 [1] : vector<8x2x7x128xf32> to vector<8x7x128xf32>
    %cst_32 = arith.constant dense<0.000000e+00> : vector<128x128xf32>
    %47 = tpu.matmul %31, %3, %cst_32 {dimension_numbers = #tpu.dot_dimension_numbers<[1], [0], [0], [1], [0, 0, 1, 1], [], []>} : vector<128x24xf32>, vector<24x128xf32>, vector<128x128xf32> -> vector<128x128xf32>
    %cst_33 = arith.constant dense<0.000000e+00> : vector<128x128xf32>
    %48 = tpu.matmul %19, %5, %cst_33 {dimension_numbers = #tpu.dot_dimension_numbers<[1], [0], [0], [1], [0, 0, 1, 1], [], []>} : vector<128x24xf32>, vector<24x128xf32>, vector<128x128xf32> -> vector<128x128xf32>
    %cst_34 = arith.constant dense<0.000000e+00> : vector<128x128xf32>
    %49 = tpu.matmul %31, %7, %cst_34 {dimension_numbers = #tpu.dot_dimension_numbers<[1], [0], [0], [1], [0, 0, 1, 1], [], []>} : vector<128x24xf32>, vector<24x128xf32>, vector<128x128xf32> -> vector<128x128xf32>
    %50 = arith.addf %48, %49 : vector<128x128xf32>
    %51 = vector.shape_cast %47 : vector<128x128xf32> to vector<16x8x128xf32>
    %52 = vector.extract_strided_slice %51 {offsets = [0, 0, 0], sizes = [16, 7, 128], strides = [1, 1, 1]} : vector<16x8x128xf32> to vector<16x7x128xf32>
    %53 = vector.shape_cast %50 : vector<128x128xf32> to vector<16x8x128xf32>
    %54 = vector.extract_strided_slice %53 {offsets = [0, 1, 0], sizes = [16, 7, 128], strides = [1, 1, 1]} : vector<16x8x128xf32> to vector<16x7x128xf32>
    %55 = arith.addf %52, %54 : vector<16x7x128xf32>
    %56 = vector.broadcast %1 : vector<1x1x128xf32> to vector<16x7x128xf32>
    %57 = arith.addf %55, %56 : vector<16x7x128xf32>
    %cst_35 = arith.constant 0.000000e+00 : f32
    %58 = vector.broadcast %cst_35 : f32 to vector<16x7x128xf32>
    %59 = arith.maximumf %57, %58 : vector<16x7x128xf32>
    %60 = vector.shape_cast %59 : vector<16x7x128xf32> to vector<8x2x7x128xf32>
    %cst_36 = arith.constant dense<0xFF800000> : vector<8x7x128xf32>
    %61 = vector.multi_reduction <maximumf>, %60, %cst_36 [1] : vector<8x2x7x128xf32> to vector<8x7x128xf32>
    %62 = arith.maximumf %46, %61 : vector<8x7x128xf32>
    %c0_37 = arith.constant 0 : index
    %c0_38 = arith.constant 0 : index
    %c0_39 = arith.constant 0 : index
    %c0_40 = arith.constant 0 : index
    %63 = vector.load %arg6[%c0_37, %c0_38, %c0_39, %c0_40] : memref<1x8x7x128xf32, #tpu.memory_space<vmem>>, vector<1x8x7x128xf32>
    %64 = vector.shape_cast %63 : vector<1x8x7x128xf32> to vector<8x7x128xf32>
    %65 = vector.shape_cast %62 : vector<8x7x128xf32> to vector<1x8x7x128xf32>
    tpu.vector_store %arg6[%c0_37, %c0_38, %c0_39, %c0_40], %65 {strides = array<i32>} : memref<1x8x7x128xf32, #tpu.memory_space<vmem>>, vector<1x8x7x128xf32>,
    return
  }
  func.func @transform_0(%arg0: i32, %arg1: i32) -> (i32, i32, i32, i32, i32) {
    %c0_i32 = arith.constant 0 : i32
    %c0_i32_0 = arith.constant 0 : i32
    %c0_i32_1 = arith.constant 0 : i32
    %c0_i32_2 = arith.constant 0 : i32
    return %arg0, %c0_i32, %arg1, %c0_i32_0, %c0_i32_1 : i32, i32, i32, i32, i32
  }
  func.func @transform_1(%arg0: i32, %arg1: i32) -> (i32, i32, i32, i32, i32) {
    %c1_i32 = arith.constant 1 : i32
    %0 = arith.addi %arg1, %c1_i32 : i32
    %c8_i32 = arith.constant 8 : i32
    %1 = arith.muli %0, %c8_i32 : i32
    %c0_i32 = arith.constant 0 : i32
    %c0_i32_0 = arith.constant 0 : i32
    %c0_i32_1 = arith.constant 0 : i32
    %c0_i32_2 = arith.constant 0 : i32
    return %arg0, %c0_i32, %1, %c0_i32_0, %c0_i32_1 : i32, i32, i32, i32, i32
  }
  func.func @transform_2(%arg0: i32, %arg1: i32) -> (i32, i32, i32) {
    %c0_i32 = arith.constant 0 : i32
    %c0_i32_0 = arith.constant 0 : i32
    %c0_i32_1 = arith.constant 0 : i32
    %c0_i32_2 = arith.constant 0 : i32
    return %c0_i32, %c0_i32_0, %c0_i32_1 : i32, i32, i32
  }
  func.func @transform_3(%arg0: i32, %arg1: i32) -> (i32, i32) {
    %c0_i32 = arith.constant 0 : i32
    %c0_i32_0 = arith.constant 0 : i32
    %c0_i32_1 = arith.constant 0 : i32
    return %c0_i32, %c0_i32_0 : i32, i32
  }
  func.func @transform_4(%arg0: i32, %arg1: i32) -> (i32, i32, i32, i32) {
    %c0_i32 = arith.constant 0 : i32
    %c0_i32_0 = arith.constant 0 : i32
    %c0_i32_1 = arith.constant 0 : i32
    return %arg0, %arg1, %c0_i32, %c0_i32_0 : i32, i32, i32, i32
  }
}

</mosaic_0001>

<llo_original>
// kernel: tpu_custom_call.1
$region0: #{tpu_custom_call.1}
  #allocation0 [shape = 'u32[]', space=smem, size = 0x4, offset = 0x4, fixed_abs, tag = 'smem constant byte address 0x4 - core index']
  #allocation1 [shape = 'u32[144,128]{1,0:T(1,128)}', space=vmem, size = 0x12000, scoped, tag = 'internal scratch']
  %s0 = inlined_call_operand.vmem [shape: f32[2,2,18,8,8], index: 0, kind: input, shape index: {}]
  %s1 = inlined_call_operand.vmem [shape: f32[2,2,18,8,8], index: 1, kind: input, shape index: {}]
  %s2 = inlined_call_operand.vmem [shape: f32[3,24,128], index: 2, kind: input, shape index: {}]
  %s3 = inlined_call_operand.vmem [shape: f32[1,128], index: 3, kind: input, shape index: {}]
  %s4 = inlined_call_operand.vmem [shape: f32[2,8,7,128], index: 4, kind: output, shape index: {}]
  %s5 = sld [smem:[#allocation0]]
  $region139: #{tpu_custom_call.1} parent=0
    _
  %s7 = ssub.s32 1, %s5
  %s8 = scalar_select 0, %s7, %s5
  $region1: #{tpu_custom_call.1} parent=0
    #allocation2 [shape = 'u8[262144]{0}', space=vmem, size = 0x40000, scoped, tag = 'input window, operand 0']
    #allocation3 [shape = 'u8[32768]{0}', space=vmem, size = 0x8000, scoped, tag = 'input window, operand 1']
    loop: start=0, step=1, limit=4
    $region2: #{tpu_custom_call.1} parent=1 // loop_pre_header
      _
    $region3: #{tpu_custom_call.1} parent=1 // loop_header
      %s10 = sphi 0, %s14
      %p11 = scmp.ge.s32.totalorder %s10, 4
      %s17 = sphi 0, %s29
      %s18 = sphi 0, %s25
      %s19 = sphi 0, %s17
      %s20 = sphi 0, %s18
      %s21 = sphi 0, %s19
      %s22 = sphi 0, %s20
      %s34 = sphi 0, %s36
      %s37 = sphi 0, %s34
      %s38 = sphi 0, %s37
      %s54 = sphi 0, %s38
      %s66 = sphi 0, %s68
      %s69 = sphi 0, %s66
      %s70 = sphi 0, %s69
      %s86 = sphi 0, %s70
      %s90 = sphi 0, %s90
      %s92 = sphi 0, %s90
      %s93 = sphi 0, %s92
      %s107 = sphi 0, %s93
      %s111 = sphi 0, %s111
      %s113 = sphi 0, %s111
      %s114 = sphi 0, %s113
      %s128 = sphi 0, %s114
      %s136 = sphi 0, %s138
      %s139 = sphi 0, %s136
      %s140 = sphi 0, %s139
      %s156 = sphi 0, %s140
    $region4: #{tpu_custom_call.1} parent=1 // loop_header_branch
      %13 = sbr.rel (%p11) target = $region8
    $region5: #{tpu_custom_call.1} parent=1 // loop_body
      %s15 = ssub.s32 %s10, 1
      %s16 = ssub.s32 %s10, 2
      %s23 = sadd.s32 1, %s18
      %p24 = scmp.ge.s32.totalorder %s23, 1
      %s25 = scalar_select %p24, 0, %s23
      %s26 = sadd.s32 1, %s17
      %s27 = scalar_select %p24, %s26, %s17
      %p28 = scmp.ge.s32.totalorder %s27, 2
      %s29 = scalar_select %p28, 0, %s27
      %s30 = ssub.s32 %s17, %s29
      %s31 = ssub.s32 %s18, %s25
      %s32 = sor.u32 %s30, %s31
      %p33 = scmp.eq.s32.totalorder %s32, 0
      %s35 = sadd.s32 %s34, 1
      %s36 = scalar_select %p33, %s34, %s35
      %p39 = pneg %p33
      %p40 = scmp.eq.s32.totalorder %s10, 1
      %p41 = por %p39, %p40
      %p42 = scmp.ne.s32.totalorder %s34, %s37
      %p43 = scmp.eq.s32.totalorder %s10, 0
      %p44 = por %p42, %p43
      %p45 = scmp.ne.s32.totalorder %s34, %s37
      %p46 = scmp.eq.s32.totalorder %s15, 1
      %p47 = por %p45, %p46
      %p48 = scmp.ne.s32.totalorder %s37, %s38
      %p49 = scmp.eq.s32.totalorder %s15, 0
      %p50 = por %p48, %p49
      %p51 = scmp.ne.s32.totalorder %s37, %s38
      %p52 = scmp.eq.s32.totalorder %s16, 1
      %p53 = por %p51, %p52
      %p55 = scmp.ne.s32.totalorder %s38, %s54
      %p56 = scmp.eq.s32.totalorder %s16, 0
      %p57 = por %p55, %p56
      %s58 = sadd.s32 %s18, 1
      %s59 = smul.u32 %s58, 8
      %s60 = sadd.s32 %s25, 1
      %s61 = smul.u32 %s60, 8
      %s62 = ssub.s32 %s17, %s29
      %s63 = ssub.s32 %s59, %s61
      %s64 = sor.u32 %s62, %s63
      %p65 = scmp.eq.s32.totalorder %s64, 0
      %s67 = sadd.s32 %s66, 1
      %s68 = scalar_select %p65, %s66, %s67
      %p71 = pneg %p65
      %p72 = scmp.eq.s32.totalorder %s10, 1
      %p73 = por %p71, %p72
      %p74 = scmp.ne.s32.totalorder %s66, %s69
      %p75 = scmp.eq.s32.totalorder %s10, 0
      %p76 = por %p74, %p75
      %p77 = scmp.ne.s32.totalorder %s66, %s69
      %p78 = scmp.eq.s32.totalorder %s15, 1
      %p79 = por %p77, %p78
      %p80 = scmp.ne.s32.totalorder %s69, %s70
      %p81 = scmp.eq.s32.totalorder %s15, 0
      %p82 = por %p80, %p81
      %p83 = scmp.ne.s32.totalorder %s69, %s70
      %p84 = scmp.eq.s32.totalorder %s16, 1
      %p85 = por %p83, %p84
      %p87 = scmp.ne.s32.totalorder %s70, %s86
      %p88 = scmp.eq.s32.totalorder %s16, 0
      %p89 = por %p87, %p88
      %s91 = sadd.s32 %s90, 1
      %p94 = scmp.eq.s32.totalorder %s10, 1
      %p95 = scmp.ne.s32.totalorder %s90, %s92
      %p96 = scmp.eq.s32.totalorder %s10, 0
      %p97 = por %p95, %p96
      %p98 = scmp.ne.s32.totalorder %s90, %s92
      %p99 = scmp.eq.s32.totalorder %s15, 1
      %p100 = por %p98, %p99
      %p101 = scmp.ne.s32.totalorder %s92, %s93
      %p102 = scmp.eq.s32.totalorder %s15, 0
      %p103 = por %p101, %p102
      %p104 = scmp.ne.s32.totalorder %s92, %s93
      %p105 = scmp.eq.s32.totalorder %s16, 1
      %p106 = por %p104, %p105
      %p108 = scmp.ne.s32.totalorder %s93, %s107
      %p109 = scmp.eq.s32.totalorder %s16, 0
      %p110 = por %p108, %p109
      %s112 = sadd.s32 %s111, 1
      %p115 = scmp.eq.s32.totalorder %s10, 1
      %p116 = scmp.ne.s32.totalorder %s111, %s113
      %p117 = scmp.eq.s32.totalorder %s10, 0
      %p118 = por %p116, %p117
      %p119 = scmp.ne.s32.totalorder %s111, %s113
      %p120 = scmp.eq.s32.totalorder %s15, 1
      %p121 = por %p119, %p120
      %p122 = scmp.ne.s32.totalorder %s113, %s114
      %p123 = scmp.eq.s32.totalorder %s15, 0
      %p124 = por %p122, %p123
      %p125 = scmp.ne.s32.totalorder %s113, %s114
      %p126 = scmp.eq.s32.totalorder %s16, 1
      %p127 = por %p125, %p126
      %p129 = scmp.ne.s32.totalorder %s114, %s128
      %p130 = scmp.eq.s32.totalorder %s16, 0
      %p131 = por %p129, %p130
      %s132 = ssub.s32 %s17, %s29
      %s133 = ssub.s32 %s18, %s25
      %s134 = sor.u32 %s132, %s133
      %p135 = scmp.eq.s32.totalorder %s134, 0
      %s137 = sadd.s32 %s136, 1
      %s138 = scalar_select %p135, %s136, %s137
      %p141 = pneg %p135
      %p142 = scmp.eq.s32.totalorder %s10, 1
      %p143 = por %p141, %p142
      %p144 = scmp.ne.s32.totalorder %s136, %s139
      %p145 = scmp.eq.s32.totalorder %s10, 0
      %p146 = por %p144, %p145
      %p147 = scmp.ne.s32.totalorder %s136, %s139
      %p148 = scmp.eq.s32.totalorder %s15, 1
      %p149 = por %p147, %p148
      %p150 = scmp.ne.s32.totalorder %s139, %s140
      %p151 = scmp.eq.s32.totalorder %s15, 0
      %p152 = por %p150, %p151
      %p153 = scmp.ne.s32.totalorder %s139, %s140
      %p154 = scmp.eq.s32.totalorder %s16, 1
      %p155 = por %p153, %p154
      %p157 = scmp.ne.s32.totalorder %s140, %s156
      %p158 = scmp.eq.s32.totalorder %s16, 0
      %p159 = por %p157, %p158
      %p160 = scmp.le.s32.totalorder 1, %s10
      %p161 = scmp.lt.s32.totalorder %s10, 3
      %p162 = pnand %p160, %p161
      %p163 = pneg %p162
      // Predicated region
      $region9: #{tpu_custom_call.1} parent=5 // pred_check
        _
      $region10: #{tpu_custom_call.1} parent=5 // pred_check_branch
        %165 = sbr.rel (%p162) target = $region12
      $region11: #{tpu_custom_call.1} parent=5 // pred_region
        %s166 = ssub.s32 %s10, 1
        // Predicated region
        $region13: #{tpu_custom_call.1} parent=11 // pred_check
          %p167 = pneg %p103
        $region14: #{tpu_custom_call.1} parent=11 // pred_check_branch
          %169 = sbr.rel (%p167) target = $region16
        $region15: #{tpu_custom_call.1} parent=11 // pred_region
          _
        $region16: #{tpu_custom_call.1} parent=11 // pred_fallthru
          _
        // Predicated region
        $region17: #{tpu_custom_call.1} parent=11 // pred_check
          %p170 = pneg %p124
        $region18: #{tpu_custom_call.1} parent=11 // pred_check_branch
          %172 = sbr.rel (%p170) target = $region20
        $region19: #{tpu_custom_call.1} parent=11 // pred_region
          _
        $region20: #{tpu_custom_call.1} parent=11 // pred_fallthru
          _
      $region12: #{tpu_custom_call.1} parent=5 // pred_fallthru
        _
      %p173 = scmp.lt.s32.totalorder %s10, 2
      // Predicated region
      $region21: #{tpu_custom_call.1} parent=5 // pred_check
        %p174 = pneg %p173
      $region22: #{tpu_custom_call.1} parent=5 // pred_check_branch
        %176 = sbr.rel (%p174) target = $region24
      $region23: #{tpu_custom_call.1} parent=5 // pred_region
        // Predicated region
        $region25: #{tpu_custom_call.1} parent=23 // pred_check
          %p177 = pneg %p44
        $region26: #{tpu_custom_call.1} parent=23 // pred_check_branch
          %179 = sbr.rel (%p177) target = $region28
        $region27: #{tpu_custom_call.1} parent=23 // pred_region
          %s180 = sand.u32 %s34, 1
          %s181 = sand.u32 %s34, 1
          %s182 = smul.addr %s181, 256
          %s183 = scalar_lea.vmem [#allocation2], %s182
          %s184 = smul.u32 16, %s18
          %s185 = ssub.s32 18, %s184
          %p186 = scmp.lt.s32.totalorder %s185, 16
          %s187 = scalar_select %p186, %s185, 16
          %s188 = smul.u32 256, %s187
          %p189 = scmp.ne.s32.totalorder 0, %s188
          %s190 = smul.addr %s17, 36
          %s191 = sadd.s32 %s184, %s190
          %s192 = smul.addr %s191, 8
          %s193 = scalar_lea.vmem %s0, %s192
          // Predicated region
          $region29: #{tpu_custom_call.1} parent=27 // pred_check
            %p194 = pneg %p189
          $region30: #{tpu_custom_call.1} parent=27 // pred_check_branch
            %196 = sbr.rel (%p194) target = $region32
          $region31: #{tpu_custom_call.1} parent=27 // pred_region
            // Predicated region
            $region33: #{tpu_custom_call.1} parent=31 // pred_check
              _
            $region34: #{tpu_custom_call.1} parent=31 // pred_check_branch
              %198 = sbr.rel (0) target = $region36
            $region35: #{tpu_custom_call.1} parent=31 // pred_region
              // Predicated region
              $region55: #{tpu_custom_call.1} parent=35 // pred_check
                _
              $region56: #{tpu_custom_call.1} parent=35 // pred_check_branch
                %311 = sbr.rel (0) target = $region58
              $region57: #{tpu_custom_call.1} parent=35 // pred_region
                %s312 = sshrl.u32 %s187, 4
                // While loop
                $region59: #{tpu_custom_call.1} parent=57 // loop_pre_header
                  _
                $region60: #{tpu_custom_call.1} parent=57 // loop_header
                  %s314 = sphi 0, %s316
                  %p315 = scmp.ge.s32.totalorder %s314, %s312
                  %s319 = sphi 0, %s388
                  %s320 = sphi %s193, %s391
                  %s321 = sphi %s183, %s392
                $region61: #{tpu_custom_call.1} parent=57 // loop_header_branch
                  %318 = sbr.rel (%p315) target = $region65
                $region62: #{tpu_custom_call.1} parent=57 // loop_body
                  %v322 = vld [vmem:[%s320] sm:$0xff]
                  %323 = vst [vmem:[%s321] sm:$0xff] %v322
                  %v324 = vld [vmem:[%s320 + $0x8] sm:$0xff]
                  %325 = vst [vmem:[%s321 + $0x8] sm:$0xff] %v324
                  %v326 = vld [vmem:[%s320 + $0x10] sm:$0xff]
                  %327 = vst [vmem:[%s321 + $0x10] sm:$0xff] %v326
                  %v328 = vld [vmem:[%s320 + $0x18] sm:$0xff]
                  %329 = vst [vmem:[%s321 + $0x18] sm:$0xff] %v328
                  %v330 = vld [vmem:[%s320 + $0x20] sm:$0xff]
                  %331 = vst [vmem:[%s321 + $0x20] sm:$0xff] %v330
                  %v332 = vld [vmem:[%s320 + $0x28] sm:$0xff]
                  %333 = vst [vmem:[%s321 + $0x28] sm:$0xff] %v332
                  %v334 = vld [vmem:[%s320 + $0x30] sm:$0xff]
                  %335 = vst [vmem:[%s321 + $0x30] sm:$0xff] %v334
                  %v336 = vld [vmem:[%s320 + $0x38] sm:$0xff]
                  %337 = vst [vmem:[%s321 + $0x38] sm:$0xff] %v336
                  %v338 = vld [vmem:[%s320 + $0x40] sm:$0xff]
                  %339 = vst [vmem:[%s321 + $0x40] sm:$0xff] %v338
                  %v340 = vld [vmem:[%s320 + $0x48] sm:$0xff]
                  %341 = vst [vmem:[%s321 + $0x48] sm:$0xff] %v340
                  %v342 = vld [vmem:[%s320 + $0x50] sm:$0xff]
                  %343 = vst [vmem:[%s321 + $0x50] sm:$0xff] %v342
                  %v344 = vld [vmem:[%s320 + $0x58] sm:$0xff]
                  %345 = vst [vmem:[%s321 + $0x58] sm:$0xff] %v344
                  %v346 = vld [vmem:[%s320 + $0x60] sm:$0xff]
                  %347 = vst [vmem:[%s321 + $0x60] sm:$0xff] %v346
                  %v348 = vld [vmem:[%s320 + $0x68] sm:$0xff]
                  %349 = vst [vmem:[%s321 + $0x68] sm:$0xff] %v348
                  %v350 = vld [vmem:[%s320 + $0x70] sm:$0xff]
                  %351 = vst [vmem:[%s321 + $0x70] sm:$0xff] %v350
                  %v352 = vld [vmem:[%s320 + $0x78] sm:$0xff]
                  %353 = vst [vmem:[%s321 + $0x78] sm:$0xff] %v352
                  %v354 = vld [vmem:[%s320 + $0x90] sm:$0xff]
                  %355 = vst [vmem:[%s321 + $0x80] sm:$0xff] %v354
                  %v356 = vld [vmem:[%s320 + $0x98] sm:$0xff]
                  %357 = vst [vmem:[%s321 + $0x88] sm:$0xff] %v356
                  %v358 = vld [vmem:[%s320 + $0xa0] sm:$0xff]
                  %359 = vst [vmem:[%s321 + $0x90] sm:$0xff] %v358
                  %v360 = vld [vmem:[%s320 + $0xa8] sm:$0xff]
                  %361 = vst [vmem:[%s321 + $0x98] sm:$0xff] %v360
                  %v362 = vld [vmem:[%s320 + $0xb0] sm:$0xff]
                  %363 = vst [vmem:[%s321 + $0xa0] sm:$0xff] %v362
                  %v364 = vld [vmem:[%s320 + $0xb8] sm:$0xff]
                  %365 = vst [vmem:[%s321 + $0xa8] sm:$0xff] %v364
                  %v366 = vld [vmem:[%s320 + $0xc0] sm:$0xff]
                  %367 = vst [vmem:[%s321 + $0xb0] sm:$0xff] %v366
                  %v368 = vld [vmem:[%s320 + $0xc8] sm:$0xff]
                  %369 = vst [vmem:[%s321 + $0xb8] sm:$0xff] %v368
                  %v370 = vld [vmem:[%s320 + $0xd0] sm:$0xff]
                  %371 = vst [vmem:[%s321 + $0xc0] sm:$0xff] %v370
                  %v372 = vld [vmem:[%s320 + $0xd8] sm:$0xff]
                  %373 = vst [vmem:[%s321 + $0xc8] sm:$0xff] %v372
                  %v374 = vld [vmem:[%s320 + $0xe0] sm:$0xff]
                  %375 = vst [vmem:[%s321 + $0xd0] sm:$0xff] %v374
                  %v376 = vld [vmem:[%s320 + $0xe8] sm:$0xff]
                  %377 = vst [vmem:[%s321 + $0xd8] sm:$0xff] %v376
                  %v378 = vld [vmem:[%s320 + $0xf0] sm:$0xff]
                  %379 = vst [vmem:[%s321 + $0xe0] sm:$0xff] %v378
                  %v380 = vld [vmem:[%s320 + $0xf8] sm:$0xff]
                  %381 = vst [vmem:[%s321 + $0xe8] sm:$0xff] %v380
                  %v382 = vld [vmem:[%s320 + $0x100] sm:$0xff]
                  %383 = vst [vmem:[%s321 + $0xf0] sm:$0xff] %v382
                  %v384 = vld [vmem:[%s320 + $0x108] sm:$0xff]
                  %385 = vst [vmem:[%s321 + $0xf8] sm:$0xff] %v384
                  %s386 = sadd.s32 1, %s319
                  %p387 = scmp.ge.s32.totalorder %s386, %s312
                  %s388 = scalar_select %p387, 0, %s386
                  %s389 = smul.u32 %s388, 128
                  %s390 = smul.u32 %s388, 128
                  %s391 = scalar_lea.vmem %s193, %s389
                  %s392 = scalar_lea.vmem %s183, %s390 [#allocation2]
                $region63: #{tpu_custom_call.1} parent=57 // loop_footer
                  %s316 = sadd.s32 %s314, 1
                $region64: #{tpu_custom_call.1} parent=57 // loop_footer_branch
                  %313 = sbr.rel target = $region60
                $region65: #{tpu_custom_call.1} parent=57 // loop_exit
                  _
                %s393 = sshrl.u32 %s187, 4
                %s394 = sand.u32 %s187, 15
                %s395 = smul.u32 %s393, 16
                %s396 = smul.u32 8, %s395
                %s397 = scalar_lea.vmem %s193, %s396
                %s398 = smul.u32 8, %s395
                %s399 = scalar_lea.vmem %s183, %s398 [#allocation2]
                // While loop
                $region66: #{tpu_custom_call.1} parent=57 // loop_pre_header
                  _
                $region67: #{tpu_custom_call.1} parent=57 // loop_header
                  %s401 = sphi 0, %s403
                  %p402 = scmp.ge.s32.totalorder %s401, %s394
                  %s406 = sphi 0, %s415
                  %s407 = sphi %s397, %s418
                  %s408 = sphi %s399, %s419
                $region68: #{tpu_custom_call.1} parent=57 // loop_header_branch
                  %405 = sbr.rel (%p402) target = $region72
                $region69: #{tpu_custom_call.1} parent=57 // loop_body
                  %v409 = vld [vmem:[%s407] sm:$0xff]
                  %410 = vst [vmem:[%s408] sm:$0xff] %v409
                  %v411 = vld [vmem:[%s407 + $0x90] sm:$0xff]
                  %412 = vst [vmem:[%s408 + $0x80] sm:$0xff] %v411
                  %s413 = sadd.s32 1, %s406
                  %p414 = scmp.ge.s32.totalorder %s413, %s394
                  %s415 = scalar_select %p414, 0, %s413
                  %s416 = smul.u32 %s415, 8
                  %s417 = smul.u32 %s415, 8
                  %s418 = scalar_lea.vmem %s397, %s416
                  %s419 = scalar_lea.vmem %s399, %s417 [#allocation2]
                $region70: #{tpu_custom_call.1} parent=57 // loop_footer
                  %s403 = sadd.s32 %s401, 1
                $region71: #{tpu_custom_call.1} parent=57 // loop_footer_branch
                  %400 = sbr.rel target = $region67
                $region72: #{tpu_custom_call.1} parent=57 // loop_exit
                  _
              $region58: #{tpu_custom_call.1} parent=35 // pred_fallthru
                _
              // Predicated region
              $region73: #{tpu_custom_call.1} parent=35 // pred_check
                _
              $region74: #{tpu_custom_call.1} parent=35 // pred_check_branch
                %421 = sbr.rel target = $region76
              $region75: #{tpu_custom_call.1} parent=35 // pred_region
                _
              $region76: #{tpu_custom_call.1} parent=35 // pred_fallthru
                _
            $region36: #{tpu_custom_call.1} parent=31 // pred_fallthru
              _
            // Predicated region
            $region37: #{tpu_custom_call.1} parent=31 // pred_check
              _
            $region38: #{tpu_custom_call.1} parent=31 // pred_check_branch
              %200 = sbr.rel target = $region40
            $region39: #{tpu_custom_call.1} parent=31 // pred_region
              %s202 = sshrl.u32 %s187, 4
              // While loop
              $region41: #{tpu_custom_call.1} parent=39 // loop_pre_header
                _
              $region42: #{tpu_custom_call.1} parent=39 // loop_header
                %s204 = sphi 0, %s206
                %p205 = scmp.ge.s32.totalorder %s204, %s202
                %s209 = sphi 0, %s278
                %s210 = sphi %s193, %s281
                %s211 = sphi %s183, %s282
              $region43: #{tpu_custom_call.1} parent=39 // loop_header_branch
                %208 = sbr.rel (%p205) target = $region47
              $region44: #{tpu_custom_call.1} parent=39 // loop_body
                %v212 = vld [vmem:[%s210] sm:$0xff]
                %213 = vst [vmem:[%s211] sm:$0xff] %v212
                %v214 = vld [vmem:[%s210 + $0x8] sm:$0xff]
                %215 = vst [vmem:[%s211 + $0x8] sm:$0xff] %v214
                %v216 = vld [vmem:[%s210 + $0x10] sm:$0xff]
                %217 = vst [vmem:[%s211 + $0x10] sm:$0xff] %v216
                %v218 = vld [vmem:[%s210 + $0x18] sm:$0xff]
                %219 = vst [vmem:[%s211 + $0x18] sm:$0xff] %v218
                %v220 = vld [vmem:[%s210 + $0x20] sm:$0xff]
                %221 = vst [vmem:[%s211 + $0x20] sm:$0xff] %v220
                %v222 = vld [vmem:[%s210 + $0x28] sm:$0xff]
                %223 = vst [vmem:[%s211 + $0x28] sm:$0xff] %v222
                %v224 = vld [vmem:[%s210 + $0x30] sm:$0xff]
                %225 = vst [vmem:[%s211 + $0x30] sm:$0xff] %v224
                %v226 = vld [vmem:[%s210 + $0x38] sm:$0xff]
                %227 = vst [vmem:[%s211 + $0x38] sm:$0xff] %v226
                %v228 = vld [vmem:[%s210 + $0x40] sm:$0xff]
                %229 = vst [vmem:[%s211 + $0x40] sm:$0xff] %v228
                %v230 = vld [vmem:[%s210 + $0x48] sm:$0xff]
                %231 = vst [vmem:[%s211 + $0x48] sm:$0xff] %v230
                %v232 = vld [vmem:[%s210 + $0x50] sm:$0xff]
                %233 = vst [vmem:[%s211 + $0x50] sm:$0xff] %v232
                %v234 = vld [vmem:[%s210 + $0x58] sm:$0xff]
                %235 = vst [vmem:[%s211 + $0x58] sm:$0xff] %v234
                %v236 = vld [vmem:[%s210 + $0x60] sm:$0xff]
                %237 = vst [vmem:[%s211 + $0x60] sm:$0xff] %v236
                %v238 = vld [vmem:[%s210 + $0x68] sm:$0xff]
                %239 = vst [vmem:[%s211 + $0x68] sm:$0xff] %v238
                %v240 = vld [vmem:[%s210 + $0x70] sm:$0xff]
                %241 = vst [vmem:[%s211 + $0x70] sm:$0xff] %v240
                %v242 = vld [vmem:[%s210 + $0x78] sm:$0xff]
                %243 = vst [vmem:[%s211 + $0x78] sm:$0xff] %v242
                %v244 = vld [vmem:[%s210 + $0x90] sm:$0xff]
                %245 = vst [vmem:[%s211 + $0x80] sm:$0xff] %v244
                %v246 = vld [vmem:[%s210 + $0x98] sm:$0xff]
                %247 = vst [vmem:[%s211 + $0x88] sm:$0xff] %v246
                %v248 = vld [vmem:[%s210 + $0xa0] sm:$0xff]
                %249 = vst [vmem:[%s211 + $0x90] sm:$0xff] %v248
                %v250 = vld [vmem:[%s210 + $0xa8] sm:$0xff]
                %251 = vst [vmem:[%s211 + $0x98] sm:$0xff] %v250
                %v252 = vld [vmem:[%s210 + $0xb0] sm:$0xff]
                %253 = vst [vmem:[%s211 + $0xa0] sm:$0xff] %v252
                %v254 = vld [vmem:[%s210 + $0xb8] sm:$0xff]
                %255 = vst [vmem:[%s211 + $0xa8] sm:$0xff] %v254
                %v256 = vld [vmem:[%s210 + $0xc0] sm:$0xff]
                %257 = vst [vmem:[%s211 + $0xb0] sm:$0xff] %v256
                %v258 = vld [vmem:[%s210 + $0xc8] sm:$0xff]
                %259 = vst [vmem:[%s211 + $0xb8] sm:$0xff] %v258
                %v260 = vld [vmem:[%s210 + $0xd0] sm:$0xff]
                %261 = vst [vmem:[%s211 + $0xc0] sm:$0xff] %v260
                %v262 = vld [vmem:[%s210 + $0xd8] sm:$0xff]
                %263 = vst [vmem:[%s211 + $0xc8] sm:$0xff] %v262
                %v264 = vld [vmem:[%s210 + $0xe0] sm:$0xff]
                %265 = vst [vmem:[%s211 + $0xd0] sm:$0xff] %v264
                %v266 = vld [vmem:[%s210 + $0xe8] sm:$0xff]
                %267 = vst [vmem:[%s211 + $0xd8] sm:$0xff] %v266
                %v268 = vld [vmem:[%s210 + $0xf0] sm:$0xff]
                %269 = vst [vmem:[%s211 + $0xe0] sm:$0xff] %v268
                %v270 = vld [vmem:[%s210 + $0xf8] sm:$0xff]
                %271 = vst [vmem:[%s211 + $0xe8] sm:$0xff] %v270
                %v272 = vld [vmem:[%s210 + $0x100] sm:$0xff]
                %273 = vst [vmem:[%s211 + $0xf0] sm:$0xff] %v272
                %v274 = vld [vmem:[%s210 + $0x108] sm:$0xff]
                %275 = vst [vmem:[%s211 + $0xf8] sm:$0xff] %v274
                %s276 = sadd.s32 1, %s209
                %p277 = scmp.ge.s32.totalorder %s276, %s202
                %s278 = scalar_select %p277, 0, %s276
                %s279 = smul.u32 %s278, 128
                %s280 = smul.u32 %s278, 128
                %s281 = scalar_lea.vmem %s193, %s279
                %s282 = scalar_lea.vmem %s183, %s280 [#allocation2]
              $region45: #{tpu_custom_call.1} parent=39 // loop_footer
                %s206 = sadd.s32 %s204, 1
              $region46: #{tpu_custom_call.1} parent=39 // loop_footer_branch
                %203 = sbr.rel target = $region42
              $region47: #{tpu_custom_call.1} parent=39 // loop_exit
                _
              %s283 = sshrl.u32 %s187, 4
              %s284 = sand.u32 %s187, 15
              %s285 = smul.u32 %s283, 16
              %s286 = smul.u32 8, %s285
              %s287 = scalar_lea.vmem %s193, %s286
              %s288 = smul.u32 8, %s285
              %s289 = scalar_lea.vmem %s183, %s288 [#allocation2]
              // While loop
              $region48: #{tpu_custom_call.1} parent=39 // loop_pre_header
                _
              $region49: #{tpu_custom_call.1} parent=39 // loop_header
                %s291 = sphi 0, %s293
                %p292 = scmp.ge.s32.totalorder %s291, %s284
                %s296 = sphi 0, %s305
                %s297 = sphi %s287, %s308
                %s298 = sphi %s289, %s309
              $region50: #{tpu_custom_call.1} parent=39 // loop_header_branch
                %295 = sbr.rel (%p292) target = $region54
              $region51: #{tpu_custom_call.1} parent=39 // loop_body
                %v299 = vld [vmem:[%s297] sm:$0xff]
                %300 = vst [vmem:[%s298] sm:$0xff] %v299
                %v301 = vld [vmem:[%s297 + $0x90] sm:$0xff]
                %302 = vst [vmem:[%s298 + $0x80] sm:$0xff] %v301
                %s303 = sadd.s32 1, %s296
                %p304 = scmp.ge.s32.totalorder %s303, %s284
                %s305 = scalar_select %p304, 0, %s303
                %s306 = smul.u32 %s305, 8
                %s307 = smul.u32 %s305, 8
                %s308 = scalar_lea.vmem %s287, %s306
                %s309 = scalar_lea.vmem %s289, %s307 [#allocation2]
              $region52: #{tpu_custom_call.1} parent=39 // loop_footer
                %s293 = sadd.s32 %s291, 1
              $region53: #{tpu_custom_call.1} parent=39 // loop_footer_branch
                %290 = sbr.rel target = $region49
              $region54: #{tpu_custom_call.1} parent=39 // loop_exit
                _
            $region40: #{tpu_custom_call.1} parent=31 // pred_fallthru
              _
          $region32: #{tpu_custom_call.1} parent=27 // pred_fallthru
            _
          %422 = vnop
        $region28: #{tpu_custom_call.1} parent=23 // pred_fallthru
          _
        // Predicated region
        $region77: #{tpu_custom_call.1} parent=23 // pred_check
          %p423 = pneg %p76
        $region78: #{tpu_custom_call.1} parent=23 // pred_check_branch
          %425 = sbr.rel (%p423) target = $region80
        $region79: #{tpu_custom_call.1} parent=23 // pred_region
          %s426 = sand.u32 %s66, 1
          %s427 = sand.u32 %s66, 1
          %s428 = smul.addr %s427, 32
          %s429 = scalar_lea.vmem [#allocation3], %s428
          %s430 = sadd.s32 %s18, 1
          %s431 = smul.u32 %s430, 8
          %s432 = smul.u32 2, %s431
          %s433 = smul.addr %s17, 36
          %s434 = sadd.s32 %s432, %s433
          %s435 = smul.addr %s434, 8
          %s436 = scalar_lea.vmem %s1, %s435
          // Predicated region
          $region81: #{tpu_custom_call.1} parent=79 // pred_check
            _
          $region82: #{tpu_custom_call.1} parent=79 // pred_check_branch
            %438 = sbr.rel (0) target = $region84
          $region83: #{tpu_custom_call.1} parent=79 // pred_region
            // Predicated region
            $region85: #{tpu_custom_call.1} parent=83 // pred_check
              _
            $region86: #{tpu_custom_call.1} parent=83 // pred_check_branch
              %440 = sbr.rel (0) target = $region88
            $region87: #{tpu_custom_call.1} parent=83 // pred_region
              // Predicated region
              $region100: #{tpu_custom_call.1} parent=87 // pred_check
                _
              $region101: #{tpu_custom_call.1} parent=87 // pred_check_branch
                %461 = sbr.rel (0) target = $region103
              $region102: #{tpu_custom_call.1} parent=87 // pred_region
                loop: start=0, step=1, limit=1
                $region104: #{tpu_custom_call.1} parent=102 // loop_pre_header
                  _
                $region105: #{tpu_custom_call.1} parent=102 // loop_header
                  %s463 = sphi 0, %s467
                  %p464 = scmp.ge.s32.totalorder %s463, 1
                  %s468 = sphi %s436, %s436
                  %s469 = sphi %s429, %s429
                $region106: #{tpu_custom_call.1} parent=102 // loop_header_branch
                  %466 = sbr.rel (%p464) target = $region110
                $region107: #{tpu_custom_call.1} parent=102 // loop_body
                  %v470 = vld [vmem:[%s468] sm:$0xff]
                  %471 = vst [vmem:[%s469] sm:$0xff] %v470
                  %v472 = vld [vmem:[%s468 + $0x8] sm:$0xff]
                  %473 = vst [vmem:[%s469 + $0x8] sm:$0xff] %v472
                  %v474 = vld [vmem:[%s468 + $0x90] sm:$0xff]
                  %475 = vst [vmem:[%s469 + $0x10] sm:$0xff] %v474
                  %v476 = vld [vmem:[%s468 + $0x98] sm:$0xff]
                  %477 = vst [vmem:[%s469 + $0x18] sm:$0xff] %v476
                $region108: #{tpu_custom_call.1} parent=102 // loop_footer
                  %s467 = sadd.s32 1, %s463
                $region109: #{tpu_custom_call.1} parent=102 // loop_footer_branch
                  %462 = sbr.rel target = $region105
                $region110: #{tpu_custom_call.1} parent=102 // loop_exit
                  _
              $region103: #{tpu_custom_call.1} parent=87 // pred_fallthru
                _
              // Predicated region
              $region111: #{tpu_custom_call.1} parent=87 // pred_check
                _
              $region112: #{tpu_custom_call.1} parent=87 // pred_check_branch
                %479 = sbr.rel target = $region114
              $region113: #{tpu_custom_call.1} parent=87 // pred_region
                _
              $region114: #{tpu_custom_call.1} parent=87 // pred_fallthru
                _
            $region88: #{tpu_custom_call.1} parent=83 // pred_fallthru
              _
            // Predicated region
            $region89: #{tpu_custom_call.1} parent=83 // pred_check
              _
            $region90: #{tpu_custom_call.1} parent=83 // pred_check_branch
              %442 = sbr.rel target = $region92
            $region91: #{tpu_custom_call.1} parent=83 // pred_region
              loop: start=0, step=1, limit=1
              $region93: #{tpu_custom_call.1} parent=91 // loop_pre_header
                _
              $region94: #{tpu_custom_call.1} parent=91 // loop_header
                %s445 = sphi 0, %s449
                %p446 = scmp.ge.s32.totalorder %s445, 1
                %s450 = sphi %s436, %s436
                %s451 = sphi %s429, %s429
              $region95: #{tpu_custom_call.1} parent=91 // loop_header_branch
                %448 = sbr.rel (%p446) target = $region99
              $region96: #{tpu_custom_call.1} parent=91 // loop_body
                %v452 = vld [vmem:[%s450] sm:$0xff]
                %453 = vst [vmem:[%s451] sm:$0xff] %v452
                %v454 = vld [vmem:[%s450 + $0x8] sm:$0xff]
                %455 = vst [vmem:[%s451 + $0x8] sm:$0xff] %v454
                %v456 = vld [vmem:[%s450 + $0x90] sm:$0xff]
                %457 = vst [vmem:[%s451 + $0x10] sm:$0xff] %v456
                %v458 = vld [vmem:[%s450 + $0x98] sm:$0xff]
                %459 = vst [vmem:[%s451 + $0x18] sm:$0xff] %v458
              $region97: #{tpu_custom_call.1} parent=91 // loop_footer
                %s449 = sadd.s32 1, %s445
              $region98: #{tpu_custom_call.1} parent=91 // loop_footer_branch
                %444 = sbr.rel target = $region94
              $region99: #{tpu_custom_call.1} parent=91 // loop_exit
                _
            $region92: #{tpu_custom_call.1} parent=83 // pred_fallthru
              _
          $region84: #{tpu_custom_call.1} parent=79 // pred_fallthru
            _
          %480 = vnop
        $region80: #{tpu_custom_call.1} parent=23 // pred_fallthru
          _
      $region24: #{tpu_custom_call.1} parent=5 // pred_fallthru
        _
      %p481 = scmp.le.s32.totalorder 1, %s10
      %p482 = scmp.lt.s32.totalorder %s10, 3
      %p483 = pnand %p481, %p482
      %p484 = pneg %p483
      // Predicated region
      $region115: #{tpu_custom_call.1} parent=5 // pred_check
        _
      $region116: #{tpu_custom_call.1} parent=5 // pred_check_branch
        %486 = sbr.rel (%p483) target = $region118
      $region117: #{tpu_custom_call.1} parent=5 // pred_region
        %s487 = ssub.s32 %s10, 1
        %s488 = sand.u32 %s37, 1
        %s489 = sand.u32 %s37, 1
        %s490 = smul.addr %s489, 256
        %s491 = scalar_lea.vmem [#allocation2], %s490
        // Predicated region
        $region119: #{tpu_custom_call.1} parent=117 // pred_check
          %p492 = pneg %p50
        $region120: #{tpu_custom_call.1} parent=117 // pred_check_branch
          %494 = sbr.rel (%p492) target = $region122
        $region121: #{tpu_custom_call.1} parent=117 // pred_region
          _
        $region122: #{tpu_custom_call.1} parent=117 // pred_fallthru
          _
        %s495 = sand.u32 %s69, 1
        %s496 = sand.u32 %s69, 1
        %s497 = smul.addr %s496, 32
        %s498 = scalar_lea.vmem [#allocation3], %s497
        // Predicated region
        $region123: #{tpu_custom_call.1} parent=117 // pred_check
          %p499 = pneg %p82
        $region124: #{tpu_custom_call.1} parent=117 // pred_check_branch
          %501 = sbr.rel (%p499) target = $region126
        $region125: #{tpu_custom_call.1} parent=117 // pred_region
          _
        $region126: #{tpu_custom_call.1} parent=117 // pred_fallthru
          _
        %s502 = sand.u32 %s37, 1
        %s503 = sand.u32 %s37, 1
        %s504 = smul.addr %s503, 256
        %s505 = scalar_lea.vmem [#allocation2], %s504
        %p506 = pneg %p50
        %p507 = pneg %p47
        %s508 = sand.u32 %s69, 1
        %s509 = sand.u32 %s69, 1
        %s510 = smul.addr %s509, 32
        %s511 = scalar_lea.vmem [#allocation3], %s510
        %p512 = pneg %p82
        %p513 = pneg %p79
        %p514 = pneg %p103
        %p515 = pneg %p100
        %p516 = pneg %p124
        %p517 = pneg %p121
        %p518 = pneg %p152
        %p519 = pneg %p149
        %s520 = smul.u32 8, %s20
        %p521 = scmp.lt.s32.totalorder %s19, 1
        %s522 = scalar_select %p521, %s19, 1
        %p523 = scmp.lt.s32.totalorder %s520, 7
        %s524 = scalar_select %p523, %s520, 7
        %s525 = smul.addr %s522, 8
        %s526 = sadd.s32 %s524, %s525
        %s527 = smul.addr %s526, 8
        %s528 = scalar_lea.vmem %s4, %s527
        %s529 = smul.u32 16, %s20
        %s530 = ssub.s32 18, %s529
        %p531 = scmp.lt.s32.totalorder %s530, 16
        %s532 = scalar_select %p531, %s530, 16
        %s533 = smul.u32 256, %s532
        %s534 = sadd.s32 %s20, 1
        %s535 = smul.u32 %s534, 8
        %s536 = smul.u32 2, %s535
        %s537 = smul.u32 8, %s20
        %p538 = scmp.lt.s32.totalorder %s19, 1
        %s539 = scalar_select %p538, %s19, 1
        %p540 = scmp.lt.s32.totalorder %s537, 7
        %s541 = scalar_select %p540, %s537, 7
        %s542 = smul.addr %s539, 8
        %s543 = sadd.s32 %s541, %s542
        %s544 = smul.addr %s543, 8
        %s545 = scalar_lea.vmem %s4, %s544
        %s546 = smul.u32 8, %s20
        %v547 = vld [vmem:[%s3] sm:$0x1]
        %v548 = vld [vmem:[%s2] sm:$0xff]
        %v549 = vld [vmem:[%s2 + $0x8] sm:$0xff]
        %v550 = vld [vmem:[%s2 + $0x10] sm:$0xff]
        %s551 = scalar_lea.vmem %s2, 24
        %v552 = vld [vmem:[%s551] sm:$0xff]
        %v553 = vld [vmem:[%s551 + $0x8] sm:$0xff]
        %v554 = vld [vmem:[%s551 + $0x10] sm:$0xff]
        %s555 = scalar_lea.vmem %s2, 48
        %v556 = vld [vmem:[%s555] sm:$0xff]
        %v557 = vld [vmem:[%s555 + $0x8] sm:$0xff]
        %v558 = vld [vmem:[%s555 + $0x10] sm:$0xff]
        %v559 = vld [vmem:[%s491] sm:$0xff]
        %v560 = vld [vmem:[%s491 + $0x8] sm:$0xff]
        %v561 = vld [vmem:[%s491 + $0x10] sm:$0xff]
        %v562 = vld [vmem:[%s491 + $0x18] sm:$0xff]
        %v563 = vld [vmem:[%s491 + $0x20] sm:$0xff]
        %v564 = vld [vmem:[%s491 + $0x28] sm:$0xff]
        %v565 = vld [vmem:[%s491 + $0x30] sm:$0xff]
        %v566 = vld [vmem:[%s491 + $0x38] sm:$0xff]
        %v567 = vld [vmem:[%s491 + $0x40] sm:$0xff]
        %v568 = vld [vmem:[%s491 + $0x48] sm:$0xff]
        %v569 = vld [vmem:[%s491 + $0x50] sm:$0xff]
        %v570 = vld [vmem:[%s491 + $0x58] sm:$0xff]
        %v571 = vld [vmem:[%s491 + $0x60] sm:$0xff]
        %v572 = vld [vmem:[%s491 + $0x68] sm:$0xff]
        %v573 = vld [vmem:[%s491 + $0x70] sm:$0xff]
        %v574 = vld [vmem:[%s491 + $0x78] sm:$0xff]
        %v575 = vld [vmem:[%s498] sm:$0xff]
        %v576 = vld [vmem:[%s498 + $0x8] sm:$0xff]
        %593 = vrot.lane.b32.xlu0 %v560, 8
        %v594 = vpop.permute.xlu0 %593
        %595 = vrot.lane.b32.xlu0 %v561, 8
        %v596 = vpop.permute.xlu0 %595
        %597 = vrot.lane.b32.xlu0 %v562, 8
        %v598 = vpop.permute.xlu0 %597
        %599 = vrot.lane.b32.xlu0 %v563, 8
        %v600 = vpop.permute.xlu0 %599
        %601 = vrot.lane.b32.xlu0 %v564, 8
        %v602 = vpop.permute.xlu0 %601
        %603 = vrot.lane.b32.xlu0 %v565, 8
        %v604 = vpop.permute.xlu0 %603
        %605 = vrot.lane.b32.xlu0 %v566, 8
        %v606 = vpop.permute.xlu0 %605
        %607 = vrot.lane.b32.xlu0 %v567, 8
        %v608 = vpop.permute.xlu0 %607
        %609 = vrot.lane.b32.xlu0 %v568, 8
        %v610 = vpop.permute.xlu0 %609
        %611 = vrot.lane.b32.xlu0 %v569, 8
        %v612 = vpop.permute.xlu0 %611
        %613 = vrot.lane.b32.xlu0 %v570, 8
        %v614 = vpop.permute.xlu0 %613
        %615 = vrot.lane.b32.xlu0 %v571, 8
        %v616 = vpop.permute.xlu0 %615
        %617 = vrot.lane.b32.xlu0 %v572, 8
        %v618 = vpop.permute.xlu0 %617
        %619 = vrot.lane.b32.xlu0 %v573, 8
        %v620 = vpop.permute.xlu0 %619
        %621 = vrot.lane.b32.xlu0 %v574, 8
        %v622 = vpop.permute.xlu0 %621
        %623 = vrot.lane.b32.xlu0 %v575, 8
        %v624 = vpop.permute.xlu0 %623
        %642 = vrot.lane.b32.xlu0 %v561, 16
        %v643 = vpop.permute.xlu0 %642
        %644 = vrot.lane.b32.xlu0 %v562, 16
        %v645 = vpop.permute.xlu0 %644
        %646 = vrot.lane.b32.xlu0 %v563, 16
        %v647 = vpop.permute.xlu0 %646
        %648 = vrot.lane.b32.xlu0 %v564, 16
        %v649 = vpop.permute.xlu0 %648
        %650 = vrot.lane.b32.xlu0 %v565, 16
        %v651 = vpop.permute.xlu0 %650
        %652 = vrot.lane.b32.xlu0 %v566, 16
        %v653 = vpop.permute.xlu0 %652
        %654 = vrot.lane.b32.xlu0 %v567, 16
        %v655 = vpop.permute.xlu0 %654
        %656 = vrot.lane.b32.xlu0 %v568, 16
        %v657 = vpop.permute.xlu0 %656
        %658 = vrot.lane.b32.xlu0 %v569, 16
        %v659 = vpop.permute.xlu0 %658
        %660 = vrot.lane.b32.xlu0 %v570, 16
        %v661 = vpop.permute.xlu0 %660
        %662 = vrot.lane.b32.xlu0 %v571, 16
        %v663 = vpop.permute.xlu0 %662
        %664 = vrot.lane.b32.xlu0 %v572, 16
        %v665 = vpop.permute.xlu0 %664
        %666 = vrot.lane.b32.xlu0 %v573, 16
        %v667 = vpop.permute.xlu0 %666
        %668 = vrot.lane.b32.xlu0 %v574, 16
        %v669 = vpop.permute.xlu0 %668
        %670 = vrot.lane.b32.xlu0 %v575, 16
        %v671 = vpop.permute.xlu0 %670
        %672 = vrot.lane.b32.xlu0 %v576, 16
        %v673 = vpop.permute.xlu0 %672
        %vm690 = vcmask 64512
        %v691 = vsel %vm690, %v559, %v594
        %v692 = vsel %vm690, %v560, %v596
        %v693 = vsel %vm690, %v561, %v598
        %v694 = vsel %vm690, %v562, %v600
        %v695 = vsel %vm690, %v563, %v602
        %v696 = vsel %vm690, %v564, %v604
        %v697 = vsel %vm690, %v565, %v606
        %v698 = vsel %vm690, %v566, %v608
        %v699 = vsel %vm690, %v567, %v610
        %v700 = vsel %vm690, %v568, %v612
        %v701 = vsel %vm690, %v569, %v614
        %v702 = vsel %vm690, %v570, %v616
        %v703 = vsel %vm690, %v571, %v618
        %v704 = vsel %vm690, %v572, %v620
        %v705 = vsel %vm690, %v573, %v622
        %v706 = vsel %vm690, %v574, %v624
        %vm707 = vcmask 130048
        %v708 = vsel %vm707, %v691, %v643
        %v709 = vsel %vm707, %v692, %v645
        %v710 = vsel %vm707, %v693, %v647
        %v711 = vsel %vm707, %v694, %v649
        %v712 = vsel %vm707, %v695, %v651
        %v713 = vsel %vm707, %v696, %v653
        %v714 = vsel %vm707, %v697, %v655
        %v715 = vsel %vm707, %v698, %v657
        %v716 = vsel %vm707, %v699, %v659
        %v717 = vsel %vm707, %v700, %v661
        %v718 = vsel %vm707, %v701, %v663
        %v719 = vsel %vm707, %v702, %v665
        %v720 = vsel %vm707, %v703, %v667
        %v721 = vsel %vm707, %v704, %v669
        %v722 = vsel %vm707, %v705, %v671
        %v723 = vsel %vm707, %v706, %v673
        %s724 = scalar_lea.vmem %s491, 128 [#allocation2]
        %v725 = vld [vmem:[%s724] sm:$0xff]
        %v726 = vld [vmem:[%s724 + $0x8] sm:$0xff]
        %v727 = vld [vmem:[%s724 + $0x10] sm:$0xff]
        %v728 = vld [vmem:[%s724 + $0x18] sm:$0xff]
        %v729 = vld [vmem:[%s724 + $0x20] sm:$0xff]
        %v730 = vld [vmem:[%s724 + $0x28] sm:$0xff]
        %v731 = vld [vmem:[%s724 + $0x30] sm:$0xff]
        %v732 = vld [vmem:[%s724 + $0x38] sm:$0xff]
        %v733 = vld [vmem:[%s724 + $0x40] sm:$0xff]
        %v734 = vld [vmem:[%s724 + $0x48] sm:$0xff]
        %v735 = vld [vmem:[%s724 + $0x50] sm:$0xff]
        %v736 = vld [vmem:[%s724 + $0x58] sm:$0xff]
        %v737 = vld [vmem:[%s724 + $0x60] sm:$0xff]
        %v738 = vld [vmem:[%s724 + $0x68] sm:$0xff]
        %v739 = vld [vmem:[%s724 + $0x70] sm:$0xff]
        %v740 = vld [vmem:[%s724 + $0x78] sm:$0xff]
        %s741 = scalar_lea.vmem %s498, 16 [#allocation3]
        %v742 = vld [vmem:[%s741] sm:$0xff]
        %v743 = vld [vmem:[%s741 + $0x8] sm:$0xff]
        %760 = vrot.lane.b32.xlu0 %v726, 8
        %v761 = vpop.permute.xlu0 %760
        %762 = vrot.lane.b32.xlu0 %v727, 8
        %v763 = vpop.permute.xlu0 %762
        %764 = vrot.lane.b32.xlu0 %v728, 8
        %v765 = vpop.permute.xlu0 %764
        %766 = vrot.lane.b32.xlu0 %v729, 8
        %v767 = vpop.permute.xlu0 %766
        %768 = vrot.lane.b32.xlu0 %v730, 8
        %v769 = vpop.permute.xlu0 %768
        %770 = vrot.lane.b32.xlu0 %v731, 8
        %v771 = vpop.permute.xlu0 %770
        %772 = vrot.lane.b32.xlu0 %v732, 8
        %v773 = vpop.permute.xlu0 %772
        %774 = vrot.lane.b32.xlu0 %v733, 8
        %v775 = vpop.permute.xlu0 %774
        %776 = vrot.lane.b32.xlu0 %v734, 8
        %v777 = vpop.permute.xlu0 %776
        %778 = vrot.lane.b32.xlu0 %v735, 8
        %v779 = vpop.permute.xlu0 %778
        %780 = vrot.lane.b32.xlu0 %v736, 8
        %v781 = vpop.permute.xlu0 %780
        %782 = vrot.lane.b32.xlu0 %v737, 8
        %v783 = vpop.permute.xlu0 %782
        %784 = vrot.lane.b32.xlu0 %v738, 8
        %v785 = vpop.permute.xlu0 %784
        %786 = vrot.lane.b32.xlu0 %v739, 8
        %v787 = vpop.permute.xlu0 %786
        %788 = vrot.lane.b32.xlu0 %v740, 8
        %v789 = vpop.permute.xlu0 %788
        %790 = vrot.lane.b32.xlu0 %v742, 8
        %v791 = vpop.permute.xlu0 %790
        %809 = vrot.lane.b32.xlu0 %v727, 16
        %v810 = vpop.permute.xlu0 %809
        %811 = vrot.lane.b32.xlu0 %v728, 16
        %v812 = vpop.permute.xlu0 %811
        %813 = vrot.lane.b32.xlu0 %v729, 16
        %v814 = vpop.permute.xlu0 %813
        %815 = vrot.lane.b32.xlu0 %v730, 16
        %v816 = vpop.permute.xlu0 %815
        %817 = vrot.lane.b32.xlu0 %v731, 16
        %v818 = vpop.permute.xlu0 %817
        %819 = vrot.lane.b32.xlu0 %v732, 16
        %v820 = vpop.permute.xlu0 %819
        %821 = vrot.lane.b32.xlu0 %v733, 16
        %v822 = vpop.permute.xlu0 %821
        %823 = vrot.lane.b32.xlu0 %v734, 16
        %v824 = vpop.permute.xlu0 %823
        %825 = vrot.lane.b32.xlu0 %v735, 16
        %v826 = vpop.permute.xlu0 %825
        %827 = vrot.lane.b32.xlu0 %v736, 16
        %v828 = vpop.permute.xlu0 %827
        %829 = vrot.lane.b32.xlu0 %v737, 16
        %v830 = vpop.permute.xlu0 %829
        %831 = vrot.lane.b32.xlu0 %v738, 16
        %v832 = vpop.permute.xlu0 %831
        %833 = vrot.lane.b32.xlu0 %v739, 16
        %v834 = vpop.permute.xlu0 %833
        %835 = vrot.lane.b32.xlu0 %v740, 16
        %v836 = vpop.permute.xlu0 %835
        %837 = vrot.lane.b32.xlu0 %v742, 16
        %v838 = vpop.permute.xlu0 %837
        %839 = vrot.lane.b32.xlu0 %v743, 16
        %v840 = vpop.permute.xlu0 %839
        %v857 = vsel %vm690, %v725, %v761
        %v858 = vsel %vm690, %v726, %v763
        %v859 = vsel %vm690, %v727, %v765
        %v860 = vsel %vm690, %v728, %v767
        %v861 = vsel %vm690, %v729, %v769
        %v862 = vsel %vm690, %v730, %v771
        %v863 = vsel %vm690, %v731, %v773
        %v864 = vsel %vm690, %v732, %v775
        %v865 = vsel %vm690, %v733, %v777
        %v866 = vsel %vm690, %v734, %v779
        %v867 = vsel %vm690, %v735, %v781
        %v868 = vsel %vm690, %v736, %v783
        %v869 = vsel %vm690, %v737, %v785
        %v870 = vsel %vm690, %v738, %v787
        %v871 = vsel %vm690, %v739, %v789
        %v872 = vsel %vm690, %v740, %v791
        %v873 = vsel %vm707, %v857, %v810
        %v874 = vsel %vm707, %v858, %v812
        %v875 = vsel %vm707, %v859, %v814
        %v876 = vsel %vm707, %v860, %v816
        %v877 = vsel %vm707, %v861, %v818
        %v878 = vsel %vm707, %v862, %v820
        %v879 = vsel %vm707, %v863, %v822
        %v880 = vsel %vm707, %v864, %v824
        %v881 = vsel %vm707, %v865, %v826
        %v882 = vsel %vm707, %v866, %v828
        %v883 = vsel %vm707, %v867, %v830
        %v884 = vsel %vm707, %v868, %v832
        %v885 = vsel %vm707, %v869, %v834
        %v886 = vsel %vm707, %v870, %v836
        %v887 = vsel %vm707, %v871, %v838
        %v888 = vsel %vm707, %v872, %v840
        %vm889 = vcmask 195584
        %v891 = vsel %vm889, %v873, 0
        %v894 = vsel %vm889, %v874, 0
        %v897 = vsel %vm889, %v875, 0
        %v900 = vsel %vm889, %v876, 0
        %v903 = vsel %vm889, %v877, 0
        %v906 = vsel %vm889, %v878, 0
        %v909 = vsel %vm889, %v879, 0
        %v912 = vsel %vm889, %v880, 0
        %v915 = vsel %vm889, %v881, 0
        %v918 = vsel %vm889, %v882, 0
        %v921 = vsel %vm889, %v883, 0
        %v924 = vsel %vm889, %v884, 0
        %v927 = vsel %vm889, %v885, 0
        %v930 = vsel %vm889, %v886, 0
        %v933 = vsel %vm889, %v887, 0
        %v936 = vsel %vm889, %v888, 0
        %938 = vmatprep.subr.mxu0 0.0
        %939 = vmatpush1.msra.mxu0 %v552
        %940 = vmatprep.subr.mxu0 0.0
        %941 = vmatpush1.msra.mxu0 %v553
        %942 = vmatprep.subr.mxu0 0.0
        %943 = vmatpush1.msra.mxu0 %v554
        %944 = vmatprep.subr.mxu0 0.0
        %945 = vmatpush1.msra.mxu0 0.0
        %946 = vmatprep.subr.mxu0 0.0
        %947 = vmatpush1.msra.mxu0 0.0
        %948 = vmatprep.subr.mxu0 0.0
        %949 = vmatpush1.msra.mxu0 0.0
        %950 = vmatprep.subr.mxu0 0.0
        %951 = vmatpush1.msra.mxu0 0.0
        %952 = vmatprep.subr.mxu0 0.0
        %953 = vmatpush1.msra.mxu0 0.0
        %954 = vmatprep.subr.mxu0 0.0
        %955 = vmatpush1.msra.mxu0 0.0
        %956 = vmatprep.subr.mxu0 0.0
        %957 = vmatpush1.msra.mxu0 0.0
        %958 = vmatprep.subr.mxu0 0.0
        %959 = vmatpush1.msra.mxu0 0.0
        %960 = vmatprep.subr.mxu0 0.0
        %961 = vmatpush1.msra.mxu0 0.0
        %962 = vmatprep.subr.mxu0 0.0
        %963 = vmatpush1.msra.mxu0 0.0
        %964 = vmatprep.subr.mxu0 0.0
        %965 = vmatpush1.msra.mxu0 0.0
        %966 = vmatprep.subr.mxu0 0.0
        %967 = vmatpush1.msra.mxu0 0.0
        %968 = vmatprep.subr.mxu0 0.0
        %969 = vmatpush1.msra.mxu0 0.0
        %970 = vmatprep.subr.mxu0 0.0
        %971 = vmatpush1.msra.mxu0 0.0
        %972 = vmatprep.subr.mxu0 0.0
        %973 = vmatpush1.msra.mxu0 0.0
        %974 = vmatprep.subr.mxu0 0.0
        %975 = vmatpush1.msra.mxu0 0.0
        %976 = vmatprep.subr.mxu0 0.0
        %977 = vmatpush1.msra.mxu0 0.0
        %978 = vmatprep.subr.mxu0 0.0
        %979 = vmatpush1.msra.mxu0 0.0
        %980 = vmatprep.subr.mxu0 0.0
        %981 = vmatpush1.msra.mxu0 0.0
        %982 = vmatprep.subr.mxu0 0.0
        %983 = vmatpush1.msra.mxu0 0.0
        %984 = vmatprep.subr.mxu0 0.0
        %985 = vmatpush1.msra.mxu0 0.0
        %986 = vmatprep.subr.mxu0 0.0
        %987 = vmatpush1.msra.mxu0 0.0
        %988 = vmatprep.subr.mxu0 0.0
        %989 = vmatpush1.msra.mxu0 0.0
        %990 = vmatprep.subr.mxu0 0.0
        %991 = vmatpush1.msra.mxu0 0.0
        %992 = vmatprep.subr.mxu0 0.0
        %993 = vmatpush1.msra.mxu0 0.0
        %994 = vmatprep.subr.mxu0 0.0
        %995 = vmatpush1.msra.mxu0 0.0
        %996 = vmatprep.subr.mxu0 0.0
        %997 = vmatpush1.msra.mxu0 0.0
        %998 = vmatprep.subr.mxu0 0.0
        %999 = vmatpush1.msra.mxu0 0.0
        %1000 = vmatprep.subr.mxu0 0.0
        %1001 = vmatpush1.msra.mxu0 0.0
        %1002 = vmatprep.mubr.f32.mxu0 0.0
        %1003 = vmatmul.mubr.f32.gmra.mrb[0].mxu0 %v891
        %v1004 = vpop.f32.mrb[0].mxu0
        %v1005 = vadd.f32 0.0, %v1004
        %v1006 = vpop.f32.mrb[0].mxu0
        %1007 = vmatprep.mubr.f32.mxu0 0.0
        %1008 = vmatmul.mubr.f32.gmra.mrb[0].mxu0 %v894
        %v1009 = vpop.f32.mrb[0].mxu0
        %v1010 = vadd.f32 0.0, %v1009
        %v1011 = vpop.f32.mrb[0].mxu0
        %1012 = vmatprep.mubr.f32.mxu0 0.0
        %1013 = vmatmul.mubr.f32.gmra.mrb[0].mxu0 %v897
        %v1014 = vpop.f32.mrb[0].mxu0
        %v1015 = vadd.f32 0.0, %v1014
        %v1016 = vpop.f32.mrb[0].mxu0
        %1017 = vmatprep.mubr.f32.mxu0 0.0
        %1018 = vmatmul.mubr.f32.gmra.mrb[0].mxu0 %v900
        %v1019 = vpop.f32.mrb[0].mxu0
        %v1020 = vadd.f32 0.0, %v1019
        %v1021 = vpop.f32.mrb[0].mxu0
        %1022 = vmatprep.mubr.f32.mxu0 0.0
        %1023 = vmatmul.mubr.f32.gmra.mrb[0].mxu0 %v903
        %v1024 = vpop.f32.mrb[0].mxu0
        %v1025 = vadd.f32 0.0, %v1024
        %v1026 = vpop.f32.mrb[0].mxu0
        %1027 = vmatprep.mubr.f32.mxu0 0.0
        %1028 = vmatmul.mubr.f32.gmra.mrb[0].mxu0 %v906
        %v1029 = vpop.f32.mrb[0].mxu0
        %v1030 = vadd.f32 0.0, %v1029
        %v1031 = vpop.f32.mrb[0].mxu0
        %1032 = vmatprep.mubr.f32.mxu0 0.0
        %1033 = vmatmul.mubr.f32.gmra.mrb[0].mxu0 %v909
        %v1034 = vpop.f32.mrb[0].mxu0
        %v1035 = vadd.f32 0.0, %v1034
        %v1036 = vpop.f32.mrb[0].mxu0
        %1037 = vmatprep.mubr.f32.mxu0 0.0
        %1038 = vmatmul.mubr.f32.gmra.mrb[0].mxu0 %v912
        %v1039 = vpop.f32.mrb[0].mxu0
        %v1040 = vadd.f32 0.0, %v1039
        %v1041 = vpop.f32.mrb[0].mxu0
        %1042 = vmatprep.mubr.f32.mxu0 0.0
        %1043 = vmatmul.mubr.f32.gmra.mrb[0].mxu0 %v915
        %v1044 = vpop.f32.mrb[0].mxu0
        %v1045 = vadd.f32 0.0, %v1044
        %v1046 = vpop.f32.mrb[0].mxu0
        %1047 = vmatprep.mubr.f32.mxu0 0.0
        %1048 = vmatmul.mubr.f32.gmra.mrb[0].mxu0 %v918
        %v1049 = vpop.f32.mrb[0].mxu0
        %v1050 = vadd.f32 0.0, %v1049
        %v1051 = vpop.f32.mrb[0].mxu0
        %1052 = vmatprep.mubr.f32.mxu0 0.0
        %1053 = vmatmul.mubr.f32.gmra.mrb[0].mxu0 %v921
        %v1054 = vpop.f32.mrb[0].mxu0
        %v1055 = vadd.f32 0.0, %v1054
        %v1056 = vpop.f32.mrb[0].mxu0
        %1057 = vmatprep.mubr.f32.mxu0 0.0
        %1058 = vmatmul.mubr.f32.gmra.mrb[0].mxu0 %v924
        %v1059 = vpop.f32.mrb[0].mxu0
        %v1060 = vadd.f32 0.0, %v1059
        %v1061 = vpop.f32.mrb[0].mxu0
        %1062 = vmatprep.mubr.f32.mxu0 0.0
        %1063 = vmatmul.mubr.f32.gmra.mrb[0].mxu0 %v927
        %v1064 = vpop.f32.mrb[0].mxu0
        %v1065 = vadd.f32 0.0, %v1064
        %v1066 = vpop.f32.mrb[0].mxu0
        %1067 = vmatprep.mubr.f32.mxu0 0.0
        %1068 = vmatmul.mubr.f32.gmra.mrb[0].mxu0 %v930
        %v1069 = vpop.f32.mrb[0].mxu0
        %v1070 = vadd.f32 0.0, %v1069
        %v1071 = vpop.f32.mrb[0].mxu0
        %1072 = vmatprep.mubr.f32.mxu0 0.0
        %1073 = vmatmul.mubr.f32.gmra.mrb[0].mxu0 %v933
        %v1074 = vpop.f32.mrb[0].mxu0
        %v1075 = vadd.f32 0.0, %v1074
        %v1076 = vpop.f32.mrb[0].mxu0
        %1077 = vmatprep.mubr.f32.mxu0 0.0
        %1078 = vmatmul.mubr.f32.gmra.mrb[0].mxu0 %v936
        %v1079 = vpop.f32.mrb[0].mxu0
        %v1080 = vadd.f32 0.0, %v1079
        %v1081 = vpop.f32.mrb[0].mxu0
        %1082 = vdwg.mxu0
        %v1084 = vsel %vm889, %v708, 0
        %v1087 = vsel %vm889, %v709, 0
        %v1090 = vsel %vm889, %v710, 0
        %v1093 = vsel %vm889, %v711, 0
        %v1096 = vsel %vm889, %v712, 0
        %v1099 = vsel %vm889, %v713, 0
        %v1102 = vsel %vm889, %v714, 0
        %v1105 = vsel %vm889, %v715, 0
        %v1108 = vsel %vm889, %v716, 0
        %v1111 = vsel %vm889, %v717, 0
        %v1114 = vsel %vm889, %v718, 0
        %v1117 = vsel %vm889, %v719, 0
        %v1120 = vsel %vm889, %v720, 0
        %v1123 = vsel %vm889, %v721, 0
        %v1126 = vsel %vm889, %v722, 0
        %v1129 = vsel %vm889, %v723, 0
        %1131 = vmatprep.subr.mxu0 0.0
        %1132 = vmatpush1.msra.mxu0 %v548
        %1133 = vmatprep.subr.mxu0 0.0
        %1134 = vmatpush1.msra.mxu0 %v549
        %1135 = vmatprep.subr.mxu0 0.0
        %1136 = vmatpush1.msra.mxu0 %v550
        %1137 = vmatprep.subr.mxu0 0.0
        %1138 = vmatpush1.msra.mxu0 0.0
        %1139 = vmatprep.subr.mxu0 0.0
        %1140 = vmatpush1.msra.mxu0 0.0
        %1141 = vmatprep.subr.mxu0 0.0
        %1142 = vmatpush1.msra.mxu0 0.0
        %1143 = vmatprep.subr.mxu0 0.0
        %1144 = vmatpush1.msra.mxu0 0.0
        %1145 = vmatprep.subr.mxu0 0.0
        %1146 = vmatpush1.msra.mxu0 0.0
        %1147 = vmatprep.subr.mxu0 0.0
        %1148 = vmatpush1.msra.mxu0 0.0
        %1149 = vmatprep.subr.mxu0 0.0
        %1150 = vmatpush1.msra.mxu0 0.0
        %1151 = vmatprep.subr.mxu0 0.0
        %1152 = vmatpush1.msra.mxu0 0.0
        %1153 = vmatprep.subr.mxu0 0.0
        %1154 = vmatpush1.msra.mxu0 0.0
        %1155 = vmatprep.subr.mxu0 0.0
        %1156 = vmatpush1.msra.mxu0 0.0
        %1157 = vmatprep.subr.mxu0 0.0
        %1158 = vmatpush1.msra.mxu0 0.0
        %1159 = vmatprep.subr.mxu0 0.0
        %1160 = vmatpush1.msra.mxu0 0.0
        %1161 = vmatprep.subr.mxu0 0.0
        %1162 = vmatpush1.msra.mxu0 0.0
        %1163 = vmatprep.subr.mxu0 0.0
        %1164 = vmatpush1.msra.mxu0 0.0
        %1165 = vmatprep.subr.mxu0 0.0
        %1166 = vmatpush1.msra.mxu0 0.0
        %1167 = vmatprep.subr.mxu0 0.0
        %1168 = vmatpush1.msra.mxu0 0.0
        %1169 = vmatprep.subr.mxu0 0.0
        %1170 = vmatpush1.msra.mxu0 0.0
        %1171 = vmatprep.subr.mxu0 0.0
        %1172 = vmatpush1.msra.mxu0 0.0
        %1173 = vmatprep.subr.mxu0 0.0
        %1174 = vmatpush1.msra.mxu0 0.0
        %1175 = vmatprep.subr.mxu0 0.0
        %1176 = vmatpush1.msra.mxu0 0.0
        %1177 = vmatprep.subr.mxu0 0.0
        %1178 = vmatpush1.msra.mxu0 0.0
        %1179 = vmatprep.subr.mxu0 0.0
        %1180 = vmatpush1.msra.mxu0 0.0
        %1181 = vmatprep.subr.mxu0 0.0
        %1182 = vmatpush1.msra.mxu0 0.0
        %1183 = vmatprep.subr.mxu0 0.0
        %1184 = vmatpush1.msra.mxu0 0.0
        %1185 = vmatprep.subr.mxu0 0.0
        %1186 = vmatpush1.msra.mxu0 0.0
        %1187 = vmatprep.subr.mxu0 0.0
        %1188 = vmatpush1.msra.mxu0 0.0
        %1189 = vmatprep.subr.mxu0 0.0
        %1190 = vmatpush1.msra.mxu0 0.0
        %1191 = vmatprep.subr.mxu0 0.0
        %1192 = vmatpush1.msra.mxu0 0.0
        %1193 = vmatprep.subr.mxu0 0.0
        %1194 = vmatpush1.msra.mxu0 0.0
        %1195 = vmatprep.mubr.f32.mxu0 0.0
        %1196 = vmatmul.mubr.f32.gmra.mrb[0].mxu0 %v1084
        %v1197 = vpop.f32.mrb[0].mxu0
        %v1198 = vadd.f32 %v1005, %v1197
        %v1199 = vpop.f32.mrb[0].mxu0
        %1200 = vmatprep.mubr.f32.mxu0 0.0
        %1201 = vmatmul.mubr.f32.gmra.mrb[0].mxu0 %v1087
        %v1202 = vpop.f32.mrb[0].mxu0
        %v1203 = vadd.f32 %v1010, %v1202
        %v1204 = vpop.f32.mrb[0].mxu0
        %1205 = vmatprep.mubr.f32.mxu0 0.0
        %1206 = vmatmul.mubr.f32.gmra.mrb[0].mxu0 %v1090
        %v1207 = vpop.f32.mrb[0].mxu0
        %v1208 = vadd.f32 %v1015, %v1207
        %v1209 = vpop.f32.mrb[0].mxu0
        %1210 = vmatprep.mubr.f32.mxu0 0.0
        %1211 = vmatmul.mubr.f32.gmra.mrb[0].mxu0 %v1093
        %v1212 = vpop.f32.mrb[0].mxu0
        %v1213 = vadd.f32 %v1020, %v1212
        %v1214 = vpop.f32.mrb[0].mxu0
        %1215 = vmatprep.mubr.f32.mxu0 0.0
        %1216 = vmatmul.mubr.f32.gmra.mrb[0].mxu0 %v1096
        %v1217 = vpop.f32.mrb[0].mxu0
        %v1218 = vadd.f32 %v1025, %v1217
        %v1219 = vpop.f32.mrb[0].mxu0
        %1220 = vmatprep.mubr.f32.mxu0 0.0
        %1221 = vmatmul.mubr.f32.gmra.mrb[0].mxu0 %v1099
        %v1222 = vpop.f32.mrb[0].mxu0
        %v1223 = vadd.f32 %v1030, %v1222
        %v1224 = vpop.f32.mrb[0].mxu0
        %1225 = vmatprep.mubr.f32.mxu0 0.0
        %1226 = vmatmul.mubr.f32.gmra.mrb[0].mxu0 %v1102
        %v1227 = vpop.f32.mrb[0].mxu0
        %v1228 = vadd.f32 %v1035, %v1227
        %v1229 = vpop.f32.mrb[0].mxu0
        %1230 = vmatprep.mubr.f32.mxu0 0.0
        %1231 = vmatmul.mubr.f32.gmra.mrb[0].mxu0 %v1105
        %v1232 = vpop.f32.mrb[0].mxu0
        %v1233 = vadd.f32 %v1040, %v1232
        %v1234 = vpop.f32.mrb[0].mxu0
        %1235 = vmatprep.mubr.f32.mxu0 0.0
        %1236 = vmatmul.mubr.f32.gmra.mrb[0].mxu0 %v1108
        %v1237 = vpop.f32.mrb[0].mxu0
        %v1238 = vadd.f32 %v1045, %v1237
        %v1239 = vpop.f32.mrb[0].mxu0
        %1240 = vmatprep.mubr.f32.mxu0 0.0
        %1241 = vmatmul.mubr.f32.gmra.mrb[0].mxu0 %v1111
        %v1242 = vpop.f32.mrb[0].mxu0
        %v1243 = vadd.f32 %v1050, %v1242
        %v1244 = vpop.f32.mrb[0].mxu0
        %1245 = vmatprep.mubr.f32.mxu0 0.0
        %1246 = vmatmul.mubr.f32.gmra.mrb[0].mxu0 %v1114
        %v1247 = vpop.f32.mrb[0].mxu0
        %v1248 = vadd.f32 %v1055, %v1247
        %v1249 = vpop.f32.mrb[0].mxu0
        %1250 = vmatprep.mubr.f32.mxu0 0.0
        %1251 = vmatmul.mubr.f32.gmra.mrb[0].mxu0 %v1117
        %v1252 = vpop.f32.mrb[0].mxu0
        %v1253 = vadd.f32 %v1060, %v1252
        %v1254 = vpop.f32.mrb[0].mxu0
        %1255 = vmatprep.mubr.f32.mxu0 0.0
        %1256 = vmatmul.mubr.f32.gmra.mrb[0].mxu0 %v1120
        %v1257 = vpop.f32.mrb[0].mxu0
        %v1258 = vadd.f32 %v1065, %v1257
        %v1259 = vpop.f32.mrb[0].mxu0
        %1260 = vmatprep.mubr.f32.mxu0 0.0
        %1261 = vmatmul.mubr.f32.gmra.mrb[0].mxu0 %v1123
        %v1262 = vpop.f32.mrb[0].mxu0
        %v1263 = vadd.f32 %v1070, %v1262
        %v1264 = vpop.f32.mrb[0].mxu0
        %1265 = vmatprep.mubr.f32.mxu0 0.0
        %1266 = vmatmul.mubr.f32.gmra.mrb[0].mxu0 %v1126
        %v1267 = vpop.f32.mrb[0].mxu0
        %v1268 = vadd.f32 %v1075, %v1267
        %v1269 = vpop.f32.mrb[0].mxu0
        %1270 = vmatprep.mubr.f32.mxu0 0.0
        %1271 = vmatmul.mubr.f32.gmra.mrb[0].mxu0 %v1129
        %v1272 = vpop.f32.mrb[0].mxu0
        %v1273 = vadd.f32 %v1080, %v1272
        %v1274 = vpop.f32.mrb[0].mxu0
        %1275 = vdwg.mxu0
        %1276 = vmatprep.subr.mxu0 0.0
        %1277 = vmatpush1.msra.mxu0 %v556
        %1278 = vmatprep.subr.mxu0 0.0
        %1279 = vmatpush1.msra.mxu0 %v557
        %1280 = vmatprep.subr.mxu0 0.0
        %1281 = vmatpush1.msra.mxu0 %v558
        %1282 = vmatprep.subr.mxu0 0.0
        %1283 = vmatpush1.msra.mxu0 0.0
        %1284 = vmatprep.subr.mxu0 0.0
        %1285 = vmatpush1.msra.mxu0 0.0
        %1286 = vmatprep.subr.mxu0 0.0
        %1287 = vmatpush1.msra.mxu0 0.0
        %1288 = vmatprep.subr.mxu0 0.0
        %1289 = vmatpush1.msra.mxu0 0.0
        %1290 = vmatprep.subr.mxu0 0.0
        %1291 = vmatpush1.msra.mxu0 0.0
        %1292 = vmatprep.subr.mxu0 0.0
        %1293 = vmatpush1.msra.mxu0 0.0
        %1294 = vmatprep.subr.mxu0 0.0
        %1295 = vmatpush1.msra.mxu0 0.0
        %1296 = vmatprep.subr.mxu0 0.0
        %1297 = vmatpush1.msra.mxu0 0.0
        %1298 = vmatprep.subr.mxu0 0.0
        %1299 = vmatpush1.msra.mxu0 0.0
        %1300 = vmatprep.subr.mxu0 0.0
        %1301 = vmatpush1.msra.mxu0 0.0
        %1302 = vmatprep.subr.mxu0 0.0
        %1303 = vmatpush1.msra.mxu0 0.0
        %1304 = vmatprep.subr.mxu0 0.0
        %1305 = vmatpush1.msra.mxu0 0.0
        %1306 = vmatprep.subr.mxu0 0.0
        %1307 = vmatpush1.msra.mxu0 0.0
        %1308 = vmatprep.subr.mxu0 0.0
        %1309 = vmatpush1.msra.mxu0 0.0
        %1310 = vmatprep.subr.mxu0 0.0
        %1311 = vmatpush1.msra.mxu0 0.0
        %1312 = vmatprep.subr.mxu0 0.0
        %1313 = vmatpush1.msra.mxu0 0.0
        %1314 = vmatprep.subr.mxu0 0.0
        %1315 = vmatpush1.msra.mxu0 0.0
        %1316 = vmatprep.subr.mxu0 0.0
        %1317 = vmatpush1.msra.mxu0 0.0
        %1318 = vmatprep.subr.mxu0 0.0
        %1319 = vmatpush1.msra.mxu0 0.0
        %1320 = vmatprep.subr.mxu0 0.0
        %1321 = vmatpush1.msra.mxu0 0.0
        %1322 = vmatprep.subr.mxu0 0.0
        %1323 = vmatpush1.msra.mxu0 0.0
        %1324 = vmatprep.subr.mxu0 0.0
        %1325 = vmatpush1.msra.mxu0 0.0
        %1326 = vmatprep.subr.mxu0 0.0
        %1327 = vmatpush1.msra.mxu0 0.0
        %1328 = vmatprep.subr.mxu0 0.0
        %1329 = vmatpush1.msra.mxu0 0.0
        %1330 = vmatprep.subr.mxu0 0.0
        %1331 = vmatpush1.msra.mxu0 0.0
        %1332 = vmatprep.subr.mxu0 0.0
        %1333 = vmatpush1.msra.mxu0 0.0
        %1334 = vmatprep.subr.mxu0 0.0
        %1335 = vmatpush1.msra.mxu0 0.0
        %1336 = vmatprep.subr.mxu0 0.0
        %1337 = vmatpush1.msra.mxu0 0.0
        %1338 = vmatprep.subr.mxu0 0.0
        %1339 = vmatpush1.msra.mxu0 0.0
        %1340 = vmatprep.mubr.f32.mxu0 0.0
        %1341 = vmatmul.mubr.f32.gmra.mrb[0].mxu0 %v1084
        %v1342 = vpop.f32.mrb[0].mxu0
        %v1343 = vadd.f32 0.0, %v1342
        %v1344 = vpop.f32.mrb[0].mxu0
        %1345 = vmatprep.mubr.f32.mxu0 0.0
        %1346 = vmatmul.mubr.f32.gmra.mrb[0].mxu0 %v1087
        %v1347 = vpop.f32.mrb[0].mxu0
        %v1348 = vadd.f32 0.0, %v1347
        %v1349 = vpop.f32.mrb[0].mxu0
        %1350 = vmatprep.mubr.f32.mxu0 0.0
        %1351 = vmatmul.mubr.f32.gmra.mrb[0].mxu0 %v1090
        %v1352 = vpop.f32.mrb[0].mxu0
        %v1353 = vadd.f32 0.0, %v1352
        %v1354 = vpop.f32.mrb[0].mxu0
        %1355 = vmatprep.mubr.f32.mxu0 0.0
        %1356 = vmatmul.mubr.f32.gmra.mrb[0].mxu0 %v1093
        %v1357 = vpop.f32.mrb[0].mxu0
        %v1358 = vadd.f32 0.0, %v1357
        %v1359 = vpop.f32.mrb[0].mxu0
        %1360 = vmatprep.mubr.f32.mxu0 0.0
        %1361 = vmatmul.mubr.f32.gmra.mrb[0].mxu0 %v1096
        %v1362 = vpop.f32.mrb[0].mxu0
        %v1363 = vadd.f32 0.0, %v1362
        %v1364 = vpop.f32.mrb[0].mxu0
        %1365 = vmatprep.mubr.f32.mxu0 0.0
        %1366 = vmatmul.mubr.f32.gmra.mrb[0].mxu0 %v1099
        %v1367 = vpop.f32.mrb[0].mxu0
        %v1368 = vadd.f32 0.0, %v1367
        %v1369 = vpop.f32.mrb[0].mxu0
        %1370 = vmatprep.mubr.f32.mxu0 0.0
        %1371 = vmatmul.mubr.f32.gmra.mrb[0].mxu0 %v1102
        %v1372 = vpop.f32.mrb[0].mxu0
        %v1373 = vadd.f32 0.0, %v1372
        %v1374 = vpop.f32.mrb[0].mxu0
        %1375 = vmatprep.mubr.f32.mxu0 0.0
        %1376 = vmatmul.mubr.f32.gmra.mrb[0].mxu0 %v1105
        %v1377 = vpop.f32.mrb[0].mxu0
        %v1378 = vadd.f32 0.0, %v1377
        %v1379 = vpop.f32.mrb[0].mxu0
        %1380 = vmatprep.mubr.f32.mxu0 0.0
        %1381 = vmatmul.mubr.f32.gmra.mrb[0].mxu0 %v1108
        %v1382 = vpop.f32.mrb[0].mxu0
        %v1383 = vadd.f32 0.0, %v1382
        %v1384 = vpop.f32.mrb[0].mxu0
        %1385 = vmatprep.mubr.f32.mxu0 0.0
        %1386 = vmatmul.mubr.f32.gmra.mrb[0].mxu0 %v1111
        %v1387 = vpop.f32.mrb[0].mxu0
        %v1388 = vadd.f32 0.0, %v1387
        %v1389 = vpop.f32.mrb[0].mxu0
        %1390 = vmatprep.mubr.f32.mxu0 0.0
        %1391 = vmatmul.mubr.f32.gmra.mrb[0].mxu0 %v1114
        %v1392 = vpop.f32.mrb[0].mxu0
        %v1393 = vadd.f32 0.0, %v1392
        %v1394 = vpop.f32.mrb[0].mxu0
        %1395 = vmatprep.mubr.f32.mxu0 0.0
        %1396 = vmatmul.mubr.f32.gmra.mrb[0].mxu0 %v1117
        %v1397 = vpop.f32.mrb[0].mxu0
        %v1398 = vadd.f32 0.0, %v1397
        %v1399 = vpop.f32.mrb[0].mxu0
        %1400 = vmatprep.mubr.f32.mxu0 0.0
        %1401 = vmatmul.mubr.f32.gmra.mrb[0].mxu0 %v1120
        %v1402 = vpop.f32.mrb[0].mxu0
        %v1403 = vadd.f32 0.0, %v1402
        %v1404 = vpop.f32.mrb[0].mxu0
        %1405 = vmatprep.mubr.f32.mxu0 0.0
        %1406 = vmatmul.mubr.f32.gmra.mrb[0].mxu0 %v1123
        %v1407 = vpop.f32.mrb[0].mxu0
        %v1408 = vadd.f32 0.0, %v1407
        %v1409 = vpop.f32.mrb[0].mxu0
        %1410 = vmatprep.mubr.f32.mxu0 0.0
        %1411 = vmatmul.mubr.f32.gmra.mrb[0].mxu0 %v1126
        %v1412 = vpop.f32.mrb[0].mxu0
        %v1413 = vadd.f32 0.0, %v1412
        %v1414 = vpop.f32.mrb[0].mxu0
        %1415 = vmatprep.mubr.f32.mxu0 0.0
        %1416 = vmatmul.mubr.f32.gmra.mrb[0].mxu0 %v1129
        %v1417 = vpop.f32.mrb[0].mxu0
        %v1418 = vadd.f32 0.0, %v1417
        %v1419 = vpop.f32.mrb[0].mxu0
        %1420 = vdwg.mxu0
        %v1437 = vrot.slane %v1343, 1
        %v1438 = vrot.slane %v1348, 1
        %v1439 = vrot.slane %v1353, 1
        %v1440 = vrot.slane %v1358, 1
        %v1441 = vrot.slane %v1363, 1
        %v1442 = vrot.slane %v1368, 1
        %v1443 = vrot.slane %v1373, 1
        %v1444 = vrot.slane %v1378, 1
        %v1445 = vrot.slane %v1383, 1
        %v1446 = vrot.slane %v1388, 1
        %v1447 = vrot.slane %v1393, 1
        %v1448 = vrot.slane %v1398, 1
        %v1449 = vrot.slane %v1403, 1
        %v1450 = vrot.slane %v1408, 1
        %v1451 = vrot.slane %v1413, 1
        %v1452 = vrot.slane %v1418, 1
        %v1469 = vadd.f32 %v1198, %v1437
        %v1470 = vadd.f32 %v1203, %v1438
        %v1471 = vadd.f32 %v1208, %v1439
        %v1472 = vadd.f32 %v1213, %v1440
        %v1473 = vadd.f32 %v1218, %v1441
        %v1474 = vadd.f32 %v1223, %v1442
        %v1475 = vadd.f32 %v1228, %v1443
        %v1476 = vadd.f32 %v1233, %v1444
        %v1477 = vadd.f32 %v1238, %v1445
        %v1478 = vadd.f32 %v1243, %v1446
        %v1479 = vadd.f32 %v1248, %v1447
        %v1480 = vadd.f32 %v1253, %v1448
        %v1481 = vadd.f32 %v1258, %v1449
        %v1482 = vadd.f32 %v1263, %v1450
        %v1483 = vadd.f32 %v1268, %v1451
        %v1484 = vadd.f32 %v1273, %v1452
        %v1486 = vlaneseq
        %v1487 = vshrl.u32 %v1486, 7
        %v1488 = vsub.s32 0, %v1487
        %v1489 = vrot.slane %v547, %v1488
        %v1491 = vadd.f32 %v1469, %v1489
        %v1492 = vadd.f32 %v1470, %v1489
        %v1493 = vadd.f32 %v1471, %v1489
        %v1494 = vadd.f32 %v1472, %v1489
        %v1495 = vadd.f32 %v1473, %v1489
        %v1496 = vadd.f32 %v1474, %v1489
        %v1497 = vadd.f32 %v1475, %v1489
        %v1498 = vadd.f32 %v1476, %v1489
        %v1499 = vadd.f32 %v1477, %v1489
        %v1500 = vadd.f32 %v1478, %v1489
        %v1501 = vadd.f32 %v1479, %v1489
        %v1502 = vadd.f32 %v1480, %v1489
        %v1503 = vadd.f32 %v1481, %v1489
        %v1504 = vadd.f32 %v1482, %v1489
        %v1505 = vadd.f32 %v1483, %v1489
        %v1506 = vadd.f32 %v1484, %v1489
        %v1507 = vmax.f32 %v1491, 0.0
        %v1508 = vmax.f32 %v1492, 0.0
        %v1509 = vmax.f32 %v1493, 0.0
        %v1510 = vmax.f32 %v1494, 0.0
        %v1511 = vmax.f32 %v1495, 0.0
        %v1512 = vmax.f32 %v1496, 0.0
        %v1513 = vmax.f32 %v1497, 0.0
        %v1514 = vmax.f32 %v1498, 0.0
        %v1515 = vmax.f32 %v1499, 0.0
        %v1516 = vmax.f32 %v1500, 0.0
        %v1517 = vmax.f32 %v1501, 0.0
        %v1518 = vmax.f32 %v1502, 0.0
        %v1519 = vmax.f32 %v1503, 0.0
        %v1520 = vmax.f32 %v1504, 0.0
        %v1521 = vmax.f32 %v1505, 0.0
        %v1522 = vmax.f32 %v1506, 0.0
        %vm1523 = vcmask 1046528
        %v1524 = vsel %vm1523, %v1507, -inf
        %v1525 = vsel %vm1523, %v1508, -inf
        %v1526 = vmax.f32 %v1524, %v1525
        %v1527 = vsel %vm1523, %v1509, -inf
        %v1528 = vsel %vm1523, %v1510, -inf
        %v1529 = vmax.f32 %v1527, %v1528
        %v1530 = vsel %vm1523, %v1511, -inf
        %v1531 = vsel %vm1523, %v1512, -inf
        %v1532 = vmax.f32 %v1530, %v1531
        %v1533 = vsel %vm1523, %v1513, -inf
        %v1534 = vsel %vm1523, %v1514, -inf
        %v1535 = vmax.f32 %v1533, %v1534
        %v1536 = vsel %vm1523, %v1515, -inf
        %v1537 = vsel %vm1523, %v1516, -inf
        %v1538 = vmax.f32 %v1536, %v1537
        %v1539 = vsel %vm1523, %v1517, -inf
        %v1540 = vsel %vm1523, %v1518, -inf
        %v1541 = vmax.f32 %v1539, %v1540
        %v1542 = vsel %vm1523, %v1519, -inf
        %v1543 = vsel %vm1523, %v1520, -inf
        %v1544 = vmax.f32 %v1542, %v1543
        %v1545 = vsel %vm1523, %v1521, -inf
        %v1546 = vsel %vm1523, %v1522, -inf
        %v1547 = vmax.f32 %v1545, %v1546
        %1548 = vmatprep.subr.mxu0 0.0
        %1549 = vmatpush1.msra.mxu0 %v548
        %1550 = vmatprep.subr.mxu0 0.0
        %1551 = vmatpush1.msra.mxu0 %v549
        %1552 = vmatprep.subr.mxu0 0.0
        %1553 = vmatpush1.msra.mxu0 %v550
        %1554 = vmatprep.subr.mxu0 0.0
        %1555 = vmatpush1.msra.mxu0 0.0
        %1556 = vmatprep.subr.mxu0 0.0
        %1557 = vmatpush1.msra.mxu0 0.0
        %1558 = vmatprep.subr.mxu0 0.0
        %1559 = vmatpush1.msra.mxu0 0.0
        %1560 = vmatprep.subr.mxu0 0.0
        %1561 = vmatpush1.msra.mxu0 0.0
        %1562 = vmatprep.subr.mxu0 0.0
        %1563 = vmatpush1.msra.mxu0 0.0
        %1564 = vmatprep.subr.mxu0 0.0
        %1565 = vmatpush1.msra.mxu0 0.0
        %1566 = vmatprep.subr.mxu0 0.0
        %1567 = vmatpush1.msra.mxu0 0.0
        %1568 = vmatprep.subr.mxu0 0.0
        %1569 = vmatpush1.msra.mxu0 0.0
        %1570 = vmatprep.subr.mxu0 0.0
        %1571 = vmatpush1.msra.mxu0 0.0
        %1572 = vmatprep.subr.mxu0 0.0
        %1573 = vmatpush1.msra.mxu0 0.0
        %1574 = vmatprep.subr.mxu0 0.0
        %1575 = vmatpush1.msra.mxu0 0.0
        %1576 = vmatprep.subr.mxu0 0.0
        %1577 = vmatpush1.msra.mxu0 0.0
        %1578 = vmatprep.subr.mxu0 0.0
        %1579 = vmatpush1.msra.mxu0 0.0
        %1580 = vmatprep.subr.mxu0 0.0
        %1581 = vmatpush1.msra.mxu0 0.0
        %1582 = vmatprep.subr.mxu0 0.0
        %1583 = vmatpush1.msra.mxu0 0.0
        %1584 = vmatprep.subr.mxu0 0.0
        %1585 = vmatpush1.msra.mxu0 0.0
        %1586 = vmatprep.subr.mxu0 0.0
        %1587 = vmatpush1.msra.mxu0 0.0
        %1588 = vmatprep.subr.mxu0 0.0
        %1589 = vmatpush1.msra.mxu0 0.0
        %1590 = vmatprep.subr.mxu0 0.0
        %1591 = vmatpush1.msra.mxu0 0.0
        %1592 = vmatprep.subr.mxu0 0.0
        %1593 = vmatpush1.msra.mxu0 0.0
        %1594 = vmatprep.subr.mxu0 0.0
        %1595 = vmatpush1.msra.mxu0 0.0
        %1596 = vmatprep.subr.mxu0 0.0
        %1597 = vmatpush1.msra.mxu0 0.0
        %1598 = vmatprep.subr.mxu0 0.0
        %1599 = vmatpush1.msra.mxu0 0.0
        %1600 = vmatprep.subr.mxu0 0.0
        %1601 = vmatpush1.msra.mxu0 0.0
        %1602 = vmatprep.subr.mxu0 0.0
        %1603 = vmatpush1.msra.mxu0 0.0
        %1604 = vmatprep.subr.mxu0 0.0
        %1605 = vmatpush1.msra.mxu0 0.0
        %1606 = vmatprep.subr.mxu0 0.0
        %1607 = vmatpush1.msra.mxu0 0.0
        %1608 = vmatprep.subr.mxu0 0.0
        %1609 = vmatpush1.msra.mxu0 0.0
        %1610 = vmatprep.subr.mxu0 0.0
        %1611 = vmatpush1.msra.mxu0 0.0
        %1612 = vmatprep.mubr.f32.mxu0 0.0
        %1613 = vmatmul.mubr.f32.gmra.mrb[0].mxu0 %v891
        %v1614 = vpop.f32.mrb[0].mxu0
        %v1615 = vadd.f32 0.0, %v1614
        %v1616 = vpop.f32.mrb[0].mxu0
        %1617 = vmatprep.mubr.f32.mxu0 0.0
        %1618 = vmatmul.mubr.f32.gmra.mrb[0].mxu0 %v894
        %v1619 = vpop.f32.mrb[0].mxu0
        %v1620 = vadd.f32 0.0, %v1619
        %v1621 = vpop.f32.mrb[0].mxu0
        %1622 = vmatprep.mubr.f32.mxu0 0.0
        %1623 = vmatmul.mubr.f32.gmra.mrb[0].mxu0 %v897
        %v1624 = vpop.f32.mrb[0].mxu0
        %v1625 = vadd.f32 0.0, %v1624
        %v1626 = vpop.f32.mrb[0].mxu0
        %1627 = vmatprep.mubr.f32.mxu0 0.0
        %1628 = vmatmul.mubr.f32.gmra.mrb[0].mxu0 %v900
        %v1629 = vpop.f32.mrb[0].mxu0
        %v1630 = vadd.f32 0.0, %v1629
        %v1631 = vpop.f32.mrb[0].mxu0
        %1632 = vmatprep.mubr.f32.mxu0 0.0
        %1633 = vmatmul.mubr.f32.gmra.mrb[0].mxu0 %v903
        %v1634 = vpop.f32.mrb[0].mxu0
        %v1635 = vadd.f32 0.0, %v1634
        %v1636 = vpop.f32.mrb[0].mxu0
        %1637 = vmatprep.mubr.f32.mxu0 0.0
        %1638 = vmatmul.mubr.f32.gmra.mrb[0].mxu0 %v906
        %v1639 = vpop.f32.mrb[0].mxu0
        %v1640 = vadd.f32 0.0, %v1639
        %v1641 = vpop.f32.mrb[0].mxu0
        %1642 = vmatprep.mubr.f32.mxu0 0.0
        %1643 = vmatmul.mubr.f32.gmra.mrb[0].mxu0 %v909
        %v1644 = vpop.f32.mrb[0].mxu0
        %v1645 = vadd.f32 0.0, %v1644
        %v1646 = vpop.f32.mrb[0].mxu0
        %1647 = vmatprep.mubr.f32.mxu0 0.0
        %1648 = vmatmul.mubr.f32.gmra.mrb[0].mxu0 %v912
        %v1649 = vpop.f32.mrb[0].mxu0
        %v1650 = vadd.f32 0.0, %v1649
        %v1651 = vpop.f32.mrb[0].mxu0
        %1652 = vmatprep.mubr.f32.mxu0 0.0
        %1653 = vmatmul.mubr.f32.gmra.mrb[0].mxu0 %v915
        %v1654 = vpop.f32.mrb[0].mxu0
        %v1655 = vadd.f32 0.0, %v1654
        %v1656 = vpop.f32.mrb[0].mxu0
        %1657 = vmatprep.mubr.f32.mxu0 0.0
        %1658 = vmatmul.mubr.f32.gmra.mrb[0].mxu0 %v918
        %v1659 = vpop.f32.mrb[0].mxu0
        %v1660 = vadd.f32 0.0, %v1659
        %v1661 = vpop.f32.mrb[0].mxu0
        %1662 = vmatprep.mubr.f32.mxu0 0.0
        %1663 = vmatmul.mubr.f32.gmra.mrb[0].mxu0 %v921
        %v1664 = vpop.f32.mrb[0].mxu0
        %v1665 = vadd.f32 0.0, %v1664
        %v1666 = vpop.f32.mrb[0].mxu0
        %1667 = vmatprep.mubr.f32.mxu0 0.0
        %1668 = vmatmul.mubr.f32.gmra.mrb[0].mxu0 %v924
        %v1669 = vpop.f32.mrb[0].mxu0
        %v1670 = vadd.f32 0.0, %v1669
        %v1671 = vpop.f32.mrb[0].mxu0
        %1672 = vmatprep.mubr.f32.mxu0 0.0
        %1673 = vmatmul.mubr.f32.gmra.mrb[0].mxu0 %v927
        %v1674 = vpop.f32.mrb[0].mxu0
        %v1675 = vadd.f32 0.0, %v1674
        %v1676 = vpop.f32.mrb[0].mxu0
        %1677 = vmatprep.mubr.f32.mxu0 0.0
        %1678 = vmatmul.mubr.f32.gmra.mrb[0].mxu0 %v930
        %v1679 = vpop.f32.mrb[0].mxu0
        %v1680 = vadd.f32 0.0, %v1679
        %v1681 = vpop.f32.mrb[0].mxu0
        %1682 = vmatprep.mubr.f32.mxu0 0.0
        %1683 = vmatmul.mubr.f32.gmra.mrb[0].mxu0 %v933
        %v1684 = vpop.f32.mrb[0].mxu0
        %v1685 = vadd.f32 0.0, %v1684
        %v1686 = vpop.f32.mrb[0].mxu0
        %1687 = vmatprep.mubr.f32.mxu0 0.0
        %1688 = vmatmul.mubr.f32.gmra.mrb[0].mxu0 %v936
        %v1689 = vpop.f32.mrb[0].mxu0
        %v1690 = vadd.f32 0.0, %v1689
        %v1691 = vpop.f32.mrb[0].mxu0
        %1692 = vdwg.mxu0
        %1693 = vmatprep.subr.mxu0 0.0
        %1694 = vmatpush1.msra.mxu0 %v556
        %1695 = vmatprep.subr.mxu0 0.0
        %1696 = vmatpush1.msra.mxu0 %v557
        %1697 = vmatprep.subr.mxu0 0.0
        %1698 = vmatpush1.msra.mxu0 %v558
        %1699 = vmatprep.subr.mxu0 0.0
        %1700 = vmatpush1.msra.mxu0 0.0
        %1701 = vmatprep.subr.mxu0 0.0
        %1702 = vmatpush1.msra.mxu0 0.0
        %1703 = vmatprep.subr.mxu0 0.0
        %1704 = vmatpush1.msra.mxu0 0.0
        %1705 = vmatprep.subr.mxu0 0.0
        %1706 = vmatpush1.msra.mxu0 0.0
        %1707 = vmatprep.subr.mxu0 0.0
        %1708 = vmatpush1.msra.mxu0 0.0
        %1709 = vmatprep.subr.mxu0 0.0
        %1710 = vmatpush1.msra.mxu0 0.0
        %1711 = vmatprep.subr.mxu0 0.0
        %1712 = vmatpush1.msra.mxu0 0.0
        %1713 = vmatprep.subr.mxu0 0.0
        %1714 = vmatpush1.msra.mxu0 0.0
        %1715 = vmatprep.subr.mxu0 0.0
        %1716 = vmatpush1.msra.mxu0 0.0
        %1717 = vmatprep.subr.mxu0 0.0
        %1718 = vmatpush1.msra.mxu0 0.0
        %1719 = vmatprep.subr.mxu0 0.0
        %1720 = vmatpush1.msra.mxu0 0.0
        %1721 = vmatprep.subr.mxu0 0.0
        %1722 = vmatpush1.msra.mxu0 0.0
        %1723 = vmatprep.subr.mxu0 0.0
        %1724 = vmatpush1.msra.mxu0 0.0
        %1725 = vmatprep.subr.mxu0 0.0
        %1726 = vmatpush1.msra.mxu0 0.0
        %1727 = vmatprep.subr.mxu0 0.0
        %1728 = vmatpush1.msra.mxu0 0.0
        %1729 = vmatprep.subr.mxu0 0.0
        %1730 = vmatpush1.msra.mxu0 0.0
        %1731 = vmatprep.subr.mxu0 0.0
        %1732 = vmatpush1.msra.mxu0 0.0
        %1733 = vmatprep.subr.mxu0 0.0
        %1734 = vmatpush1.msra.mxu0 0.0
        %1735 = vmatprep.subr.mxu0 0.0
        %1736 = vmatpush1.msra.mxu0 0.0
        %1737 = vmatprep.subr.mxu0 0.0
        %1738 = vmatpush1.msra.mxu0 0.0
        %1739 = vmatprep.subr.mxu0 0.0
        %1740 = vmatpush1.msra.mxu0 0.0
        %1741 = vmatprep.subr.mxu0 0.0
        %1742 = vmatpush1.msra.mxu0 0.0
        %1743 = vmatprep.subr.mxu0 0.0
        %1744 = vmatpush1.msra.mxu0 0.0
        %1745 = vmatprep.subr.mxu0 0.0
        %1746 = vmatpush1.msra.mxu0 0.0
        %1747 = vmatprep.subr.mxu0 0.0
        %1748 = vmatpush1.msra.mxu0 0.0
        %1749 = vmatprep.subr.mxu0 0.0
        %1750 = vmatpush1.msra.mxu0 0.0
        %1751 = vmatprep.subr.mxu0 0.0
        %1752 = vmatpush1.msra.mxu0 0.0
        %1753 = vmatprep.subr.mxu0 0.0
        %1754 = vmatpush1.msra.mxu0 0.0
        %1755 = vmatprep.subr.mxu0 0.0
        %1756 = vmatpush1.msra.mxu0 0.0
        %1757 = vmatprep.mubr.f32.mxu0 0.0
        %1758 = vmatmul.mubr.f32.gmra.mrb[0].mxu0 %v891
        %v1759 = vpop.f32.mrb[0].mxu0
        %v1760 = vadd.f32 0.0, %v1759
        %v1761 = vpop.f32.mrb[0].mxu0
        %1762 = vmatprep.mubr.f32.mxu0 0.0
        %1763 = vmatmul.mubr.f32.gmra.mrb[0].mxu0 %v894
        %v1764 = vpop.f32.mrb[0].mxu0
        %v1765 = vadd.f32 0.0, %v1764
        %v1766 = vpop.f32.mrb[0].mxu0
        %1767 = vmatprep.mubr.f32.mxu0 0.0
        %1768 = vmatmul.mubr.f32.gmra.mrb[0].mxu0 %v897
        %v1769 = vpop.f32.mrb[0].mxu0
        %v1770 = vadd.f32 0.0, %v1769
        %v1771 = vpop.f32.mrb[0].mxu0
        %1772 = vmatprep.mubr.f32.mxu0 0.0
        %1773 = vmatmul.mubr.f32.gmra.mrb[0].mxu0 %v900
        %v1774 = vpop.f32.mrb[0].mxu0
        %v1775 = vadd.f32 0.0, %v1774
        %v1776 = vpop.f32.mrb[0].mxu0
        %1777 = vmatprep.mubr.f32.mxu0 0.0
        %1778 = vmatmul.mubr.f32.gmra.mrb[0].mxu0 %v903
        %v1779 = vpop.f32.mrb[0].mxu0
        %v1780 = vadd.f32 0.0, %v1779
        %v1781 = vpop.f32.mrb[0].mxu0
        %1782 = vmatprep.mubr.f32.mxu0 0.0
        %1783 = vmatmul.mubr.f32.gmra.mrb[0].mxu0 %v906
        %v1784 = vpop.f32.mrb[0].mxu0
        %v1785 = vadd.f32 0.0, %v1784
        %v1786 = vpop.f32.mrb[0].mxu0
        %1787 = vmatprep.mubr.f32.mxu0 0.0
        %1788 = vmatmul.mubr.f32.gmra.mrb[0].mxu0 %v909
        %v1789 = vpop.f32.mrb[0].mxu0
        %v1790 = vadd.f32 0.0, %v1789
        %v1791 = vpop.f32.mrb[0].mxu0
        %1792 = vmatprep.mubr.f32.mxu0 0.0
        %1793 = vmatmul.mubr.f32.gmra.mrb[0].mxu0 %v912
        %v1794 = vpop.f32.mrb[0].mxu0
        %v1795 = vadd.f32 0.0, %v1794
        %v1796 = vpop.f32.mrb[0].mxu0
        %1797 = vmatprep.mubr.f32.mxu0 0.0
        %1798 = vmatmul.mubr.f32.gmra.mrb[0].mxu0 %v915
        %v1799 = vpop.f32.mrb[0].mxu0
        %v1800 = vadd.f32 0.0, %v1799
        %v1801 = vpop.f32.mrb[0].mxu0
        %1802 = vmatprep.mubr.f32.mxu0 0.0
        %1803 = vmatmul.mubr.f32.gmra.mrb[0].mxu0 %v918
        %v1804 = vpop.f32.mrb[0].mxu0
        %v1805 = vadd.f32 0.0, %v1804
        %v1806 = vpop.f32.mrb[0].mxu0
        %1807 = vmatprep.mubr.f32.mxu0 0.0
        %1808 = vmatmul.mubr.f32.gmra.mrb[0].mxu0 %v921
        %v1809 = vpop.f32.mrb[0].mxu0
        %v1810 = vadd.f32 0.0, %v1809
        %v1811 = vpop.f32.mrb[0].mxu0
        %1812 = vmatprep.mubr.f32.mxu0 0.0
        %1813 = vmatmul.mubr.f32.gmra.mrb[0].mxu0 %v924
        %v1814 = vpop.f32.mrb[0].mxu0
        %v1815 = vadd.f32 0.0, %v1814
        %v1816 = vpop.f32.mrb[0].mxu0
        %1817 = vmatprep.mubr.f32.mxu0 0.0
        %1818 = vmatmul.mubr.f32.gmra.mrb[0].mxu0 %v927
        %v1819 = vpop.f32.mrb[0].mxu0
        %v1820 = vadd.f32 0.0, %v1819
        %v1821 = vpop.f32.mrb[0].mxu0
        %1822 = vmatprep.mubr.f32.mxu0 0.0
        %1823 = vmatmul.mubr.f32.gmra.mrb[0].mxu0 %v930
        %v1824 = vpop.f32.mrb[0].mxu0
        %v1825 = vadd.f32 0.0, %v1824
        %v1826 = vpop.f32.mrb[0].mxu0
        %1827 = vmatprep.mubr.f32.mxu0 0.0
        %1828 = vmatmul.mubr.f32.gmra.mrb[0].mxu0 %v933
        %v1829 = vpop.f32.mrb[0].mxu0
        %v1830 = vadd.f32 0.0, %v1829
        %v1831 = vpop.f32.mrb[0].mxu0
        %1832 = vmatprep.mubr.f32.mxu0 0.0
        %1833 = vmatmul.mubr.f32.gmra.mrb[0].mxu0 %v936
        %v1834 = vpop.f32.mrb[0].mxu0
        %v1835 = vadd.f32 0.0, %v1834
        %v1836 = vpop.f32.mrb[0].mxu0
        %1837 = vdwg.mxu0
        %1838 = vmatprep.subr.mxu0 0.0
        %1839 = vmatpush1.msra.mxu0 %v552
        %1840 = vmatprep.subr.mxu0 0.0
        %1841 = vmatpush1.msra.mxu0 %v553
        %1842 = vmatprep.subr.mxu0 0.0
        %1843 = vmatpush1.msra.mxu0 %v554
        %1844 = vmatprep.subr.mxu0 0.0
        %1845 = vmatpush1.msra.mxu0 0.0
        %1846 = vmatprep.subr.mxu0 0.0
        %1847 = vmatpush1.msra.mxu0 0.0
        %1848 = vmatprep.subr.mxu0 0.0
        %1849 = vmatpush1.msra.mxu0 0.0
        %1850 = vmatprep.subr.mxu0 0.0
        %1851 = vmatpush1.msra.mxu0 0.0
        %1852 = vmatprep.subr.mxu0 0.0
        %1853 = vmatpush1.msra.mxu0 0.0
        %1854 = vmatprep.subr.mxu0 0.0
        %1855 = vmatpush1.msra.mxu0 0.0
        %1856 = vmatprep.subr.mxu0 0.0
        %1857 = vmatpush1.msra.mxu0 0.0
        %1858 = vmatprep.subr.mxu0 0.0
        %1859 = vmatpush1.msra.mxu0 0.0
        %1860 = vmatprep.subr.mxu0 0.0
        %1861 = vmatpush1.msra.mxu0 0.0
        %1862 = vmatprep.subr.mxu0 0.0
        %1863 = vmatpush1.msra.mxu0 0.0
        %1864 = vmatprep.subr.mxu0 0.0
        %1865 = vmatpush1.msra.mxu0 0.0
        %1866 = vmatprep.subr.mxu0 0.0
        %1867 = vmatpush1.msra.mxu0 0.0
        %1868 = vmatprep.subr.mxu0 0.0
        %1869 = vmatpush1.msra.mxu0 0.0
        %1870 = vmatprep.subr.mxu0 0.0
        %1871 = vmatpush1.msra.mxu0 0.0
        %1872 = vmatprep.subr.mxu0 0.0
        %1873 = vmatpush1.msra.mxu0 0.0
        %1874 = vmatprep.subr.mxu0 0.0
        %1875 = vmatpush1.msra.mxu0 0.0
        %1876 = vmatprep.subr.mxu0 0.0
        %1877 = vmatpush1.msra.mxu0 0.0
        %1878 = vmatprep.subr.mxu0 0.0
        %1879 = vmatpush1.msra.mxu0 0.0
        %1880 = vmatprep.subr.mxu0 0.0
        %1881 = vmatpush1.msra.mxu0 0.0
        %1882 = vmatprep.subr.mxu0 0.0
        %1883 = vmatpush1.msra.mxu0 0.0
        %1884 = vmatprep.subr.mxu0 0.0
        %1885 = vmatpush1.msra.mxu0 0.0
        %1886 = vmatprep.subr.mxu0 0.0
        %1887 = vmatpush1.msra.mxu0 0.0
        %1888 = vmatprep.subr.mxu0 0.0
        %1889 = vmatpush1.msra.mxu0 0.0
        %1890 = vmatprep.subr.mxu0 0.0
        %1891 = vmatpush1.msra.mxu0 0.0
        %1892 = vmatprep.subr.mxu0 0.0
        %1893 = vmatpush1.msra.mxu0 0.0
        %1894 = vmatprep.subr.mxu0 0.0
        %1895 = vmatpush1.msra.mxu0 0.0
        %1896 = vmatprep.subr.mxu0 0.0
        %1897 = vmatpush1.msra.mxu0 0.0
        %1898 = vmatprep.subr.mxu0 0.0
        %1899 = vmatpush1.msra.mxu0 0.0
        %1900 = vmatprep.subr.mxu0 0.0
        %1901 = vmatpush1.msra.mxu0 0.0
        %1902 = vmatprep.mubr.f32.mxu0 0.0
        %1903 = vmatmul.mubr.f32.gmra.mrb[0].mxu0 %v1084
        %v1904 = vpop.f32.mrb[0].mxu0
        %v1905 = vadd.f32 %v1760, %v1904
        %v1906 = vpop.f32.mrb[0].mxu0
        %1907 = vmatprep.mubr.f32.mxu0 0.0
        %1908 = vmatmul.mubr.f32.gmra.mrb[0].mxu0 %v1087
        %v1909 = vpop.f32.mrb[0].mxu0
        %v1910 = vadd.f32 %v1765, %v1909
        %v1911 = vpop.f32.mrb[0].mxu0
        %1912 = vmatprep.mubr.f32.mxu0 0.0
        %1913 = vmatmul.mubr.f32.gmra.mrb[0].mxu0 %v1090
        %v1914 = vpop.f32.mrb[0].mxu0
        %v1915 = vadd.f32 %v1770, %v1914
        %v1916 = vpop.f32.mrb[0].mxu0
        %1917 = vmatprep.mubr.f32.mxu0 0.0
        %1918 = vmatmul.mubr.f32.gmra.mrb[0].mxu0 %v1093
        %v1919 = vpop.f32.mrb[0].mxu0
        %v1920 = vadd.f32 %v1775, %v1919
        %v1921 = vpop.f32.mrb[0].mxu0
        %1922 = vmatprep.mubr.f32.mxu0 0.0
        %1923 = vmatmul.mubr.f32.gmra.mrb[0].mxu0 %v1096
        %v1924 = vpop.f32.mrb[0].mxu0
        %v1925 = vadd.f32 %v1780, %v1924
        %v1926 = vpop.f32.mrb[0].mxu0
        %1927 = vmatprep.mubr.f32.mxu0 0.0
        %1928 = vmatmul.mubr.f32.gmra.mrb[0].mxu0 %v1099
        %v1929 = vpop.f32.mrb[0].mxu0
        %v1930 = vadd.f32 %v1785, %v1929
        %v1931 = vpop.f32.mrb[0].mxu0
        %1932 = vmatprep.mubr.f32.mxu0 0.0
        %1933 = vmatmul.mubr.f32.gmra.mrb[0].mxu0 %v1102
        %v1934 = vpop.f32.mrb[0].mxu0
        %v1935 = vadd.f32 %v1790, %v1934
        %v1936 = vpop.f32.mrb[0].mxu0
        %1937 = vmatprep.mubr.f32.mxu0 0.0
        %1938 = vmatmul.mubr.f32.gmra.mrb[0].mxu0 %v1105
        %v1939 = vpop.f32.mrb[0].mxu0
        %v1940 = vadd.f32 %v1795, %v1939
        %v1941 = vpop.f32.mrb[0].mxu0
        %1942 = vmatprep.mubr.f32.mxu0 0.0
        %1943 = vmatmul.mubr.f32.gmra.mrb[0].mxu0 %v1108
        %v1944 = vpop.f32.mrb[0].mxu0
        %v1945 = vadd.f32 %v1800, %v1944
        %v1946 = vpop.f32.mrb[0].mxu0
        %1947 = vmatprep.mubr.f32.mxu0 0.0
        %1948 = vmatmul.mubr.f32.gmra.mrb[0].mxu0 %v1111
        %v1949 = vpop.f32.mrb[0].mxu0
        %v1950 = vadd.f32 %v1805, %v1949
        %v1951 = vpop.f32.mrb[0].mxu0
        %1952 = vmatprep.mubr.f32.mxu0 0.0
        %1953 = vmatmul.mubr.f32.gmra.mrb[0].mxu0 %v1114
        %v1954 = vpop.f32.mrb[0].mxu0
        %v1955 = vadd.f32 %v1810, %v1954
        %v1956 = vpop.f32.mrb[0].mxu0
        %1957 = vmatprep.mubr.f32.mxu0 0.0
        %1958 = vmatmul.mubr.f32.gmra.mrb[0].mxu0 %v1117
        %v1959 = vpop.f32.mrb[0].mxu0
        %v1960 = vadd.f32 %v1815, %v1959
        %v1961 = vpop.f32.mrb[0].mxu0
        %1962 = vmatprep.mubr.f32.mxu0 0.0
        %1963 = vmatmul.mubr.f32.gmra.mrb[0].mxu0 %v1120
        %v1964 = vpop.f32.mrb[0].mxu0
        %v1965 = vadd.f32 %v1820, %v1964
        %v1966 = vpop.f32.mrb[0].mxu0
        %1967 = vmatprep.mubr.f32.mxu0 0.0
        %1968 = vmatmul.mubr.f32.gmra.mrb[0].mxu0 %v1123
        %v1969 = vpop.f32.mrb[0].mxu0
        %v1970 = vadd.f32 %v1825, %v1969
        %v1971 = vpop.f32.mrb[0].mxu0
        %1972 = vmatprep.mubr.f32.mxu0 0.0
        %1973 = vmatmul.mubr.f32.gmra.mrb[0].mxu0 %v1126
        %v1974 = vpop.f32.mrb[0].mxu0
        %v1975 = vadd.f32 %v1830, %v1974
        %v1976 = vpop.f32.mrb[0].mxu0
        %1977 = vmatprep.mubr.f32.mxu0 0.0
        %1978 = vmatmul.mubr.f32.gmra.mrb[0].mxu0 %v1129
        %v1979 = vpop.f32.mrb[0].mxu0
        %v1980 = vadd.f32 %v1835, %v1979
        %v1981 = vpop.f32.mrb[0].mxu0
        %1982 = vdwg.mxu0
        %v1999 = vrot.slane %v1905, 1
        %v2000 = vrot.slane %v1910, 1
        %v2001 = vrot.slane %v1915, 1
        %v2002 = vrot.slane %v1920, 1
        %v2003 = vrot.slane %v1925, 1
        %v2004 = vrot.slane %v1930, 1
        %v2005 = vrot.slane %v1935, 1
        %v2006 = vrot.slane %v1940, 1
        %v2007 = vrot.slane %v1945, 1
        %v2008 = vrot.slane %v1950, 1
        %v2009 = vrot.slane %v1955, 1
        %v2010 = vrot.slane %v1960, 1
        %v2011 = vrot.slane %v1965, 1
        %v2012 = vrot.slane %v1970, 1
        %v2013 = vrot.slane %v1975, 1
        %v2014 = vrot.slane %v1980, 1
        %v2031 = vadd.f32 %v1615, %v1999
        %v2032 = vadd.f32 %v1620, %v2000
        %v2033 = vadd.f32 %v1625, %v2001
        %v2034 = vadd.f32 %v1630, %v2002
        %v2035 = vadd.f32 %v1635, %v2003
        %v2036 = vadd.f32 %v1640, %v2004
        %v2037 = vadd.f32 %v1645, %v2005
        %v2038 = vadd.f32 %v1650, %v2006
        %v2039 = vadd.f32 %v1655, %v2007
        %v2040 = vadd.f32 %v1660, %v2008
        %v2041 = vadd.f32 %v1665, %v2009
        %v2042 = vadd.f32 %v1670, %v2010
        %v2043 = vadd.f32 %v1675, %v2011
        %v2044 = vadd.f32 %v1680, %v2012
        %v2045 = vadd.f32 %v1685, %v2013
        %v2046 = vadd.f32 %v1690, %v2014
        %v2047 = vadd.f32 %v2031, %v1489
        %v2048 = vadd.f32 %v2032, %v1489
        %v2049 = vadd.f32 %v2033, %v1489
        %v2050 = vadd.f32 %v2034, %v1489
        %v2051 = vadd.f32 %v2035, %v1489
        %v2052 = vadd.f32 %v2036, %v1489
        %v2053 = vadd.f32 %v2037, %v1489
        %v2054 = vadd.f32 %v2038, %v1489
        %v2055 = vadd.f32 %v2039, %v1489
        %v2056 = vadd.f32 %v2040, %v1489
        %v2057 = vadd.f32 %v2041, %v1489
        %v2058 = vadd.f32 %v2042, %v1489
        %v2059 = vadd.f32 %v2043, %v1489
        %v2060 = vadd.f32 %v2044, %v1489
        %v2061 = vadd.f32 %v2045, %v1489
        %v2062 = vadd.f32 %v2046, %v1489
        %v2063 = vmax.f32 %v2047, 0.0
        %v2064 = vmax.f32 %v2048, 0.0
        %v2065 = vmax.f32 %v2049, 0.0
        %v2066 = vmax.f32 %v2050, 0.0
        %v2067 = vmax.f32 %v2051, 0.0
        %v2068 = vmax.f32 %v2052, 0.0
        %v2069 = vmax.f32 %v2053, 0.0
        %v2070 = vmax.f32 %v2054, 0.0
        %v2071 = vmax.f32 %v2055, 0.0
        %v2072 = vmax.f32 %v2056, 0.0
        %v2073 = vmax.f32 %v2057, 0.0
        %v2074 = vmax.f32 %v2058, 0.0
        %v2075 = vmax.f32 %v2059, 0.0
        %v2076 = vmax.f32 %v2060, 0.0
        %v2077 = vmax.f32 %v2061, 0.0
        %v2078 = vmax.f32 %v2062, 0.0
        %v2079 = vsel %vm1523, %v2063, -inf
        %v2080 = vsel %vm1523, %v2064, -inf
        %v2081 = vmax.f32 %v2079, %v2080
        %v2082 = vsel %vm1523, %v2065, -inf
        %v2083 = vsel %vm1523, %v2066, -inf
        %v2084 = vmax.f32 %v2082, %v2083
        %v2085 = vsel %vm1523, %v2067, -inf
        %v2086 = vsel %vm1523, %v2068, -inf
        %v2087 = vmax.f32 %v2085, %v2086
        %v2088 = vsel %vm1523, %v2069, -inf
        %v2089 = vsel %vm1523, %v2070, -inf
        %v2090 = vmax.f32 %v2088, %v2089
        %v2091 = vsel %vm1523, %v2071, -inf
        %v2092 = vsel %vm1523, %v2072, -inf
        %v2093 = vmax.f32 %v2091, %v2092
        %v2094 = vsel %vm1523, %v2073, -inf
        %v2095 = vsel %vm1523, %v2074, -inf
        %v2096 = vmax.f32 %v2094, %v2095
        %v2097 = vsel %vm1523, %v2075, -inf
        %v2098 = vsel %vm1523, %v2076, -inf
        %v2099 = vmax.f32 %v2097, %v2098
        %v2100 = vsel %vm1523, %v2077, -inf
        %v2101 = vsel %vm1523, %v2078, -inf
        %v2102 = vmax.f32 %v2100, %v2101
        %v2103 = vmax.f32 %v1526, %v2081
        %v2104 = vmax.f32 %v1529, %v2084
        %v2105 = vmax.f32 %v1532, %v2087
        %v2106 = vmax.f32 %v1535, %v2090
        %v2107 = vmax.f32 %v1538, %v2093
        %v2108 = vmax.f32 %v1541, %v2096
        %v2109 = vmax.f32 %v1544, %v2099
        %v2110 = vmax.f32 %v1547, %v2102
        %2111 = vst [vmem:[%s545] sm:$0x7f] %v2103
        %2112 = vst [vmem:[%s545 + $0x8] sm:$0x7f] %v2104
        %2113 = vst [vmem:[%s545 + $0x10] sm:$0x7f] %v2105
        %2114 = vst [vmem:[%s545 + $0x18] sm:$0x7f] %v2106
        %2115 = vst [vmem:[%s545 + $0x20] sm:$0x7f] %v2107
        %2116 = vst [vmem:[%s545 + $0x28] sm:$0x7f] %v2108
        %2117 = vst [vmem:[%s545 + $0x30] sm:$0x7f] %v2109
        %2118 = vst [vmem:[%s545 + $0x38] sm:$0x7f] %v2110
        %s2119 = smul.u32 8, %s20
        %p2120 = scmp.lt.s32.totalorder %s19, 1
        %s2121 = scalar_select %p2120, %s19, 1
        %p2122 = scmp.lt.s32.totalorder %s2119, 7
        %s2123 = scalar_select %p2122, %s2119, 7
        %s2124 = smul.addr %s2121, 8
        %s2125 = sadd.s32 %s2123, %s2124
        %s2126 = smul.addr %s2125, 8
        %s2127 = scalar_lea.vmem %s4, %s2126
        // Predicated region
        $region127: #{tpu_custom_call.1} parent=117 // pred_check
          %p2128 = pneg %p149
        $region128: #{tpu_custom_call.1} parent=117 // pred_check_branch
          %2130 = sbr.rel (%p2128) target = $region130
        $region129: #{tpu_custom_call.1} parent=117 // pred_region
          %s2131 = smul.u32 8, %s20
        $region130: #{tpu_custom_call.1} parent=117 // pred_fallthru
          _
      $region118: #{tpu_custom_call.1} parent=5 // pred_fallthru
        _
      %p2132 = scmp.le.s32.totalorder 2, %s10
      // Predicated region
      $region131: #{tpu_custom_call.1} parent=5 // pred_check
        %p2133 = pneg %p2132
      $region132: #{tpu_custom_call.1} parent=5 // pred_check_branch
        %2135 = sbr.rel (%p2133) target = $region134
      $region133: #{tpu_custom_call.1} parent=5 // pred_region
        %s2136 = ssub.s32 %s10, 2
        // Predicated region
        $region135: #{tpu_custom_call.1} parent=133 // pred_check
          %p2137 = pneg %p155
        $region136: #{tpu_custom_call.1} parent=133 // pred_check_branch
          %2139 = sbr.rel (%p2137) target = $region138
        $region137: #{tpu_custom_call.1} parent=133 // pred_region
          %s2140 = smul.u32 8, %s22
          %p2141 = scmp.lt.s32.totalorder %s21, 1
          %s2142 = scalar_select %p2141, %s21, 1
          %p2143 = scmp.lt.s32.totalorder %s2140, 7
          %s2144 = scalar_select %p2143, %s2140, 7
          %s2145 = smul.addr %s2142, 8
          %s2146 = sadd.s32 %s2144, %s2145
          %s2147 = smul.addr %s2146, 8
          %s2148 = scalar_lea.vmem %s4, %s2147
        $region138: #{tpu_custom_call.1} parent=133 // pred_fallthru
          _
      $region134: #{tpu_custom_call.1} parent=5 // pred_fallthru
        _
    $region6: #{tpu_custom_call.1} parent=1 // loop_footer
      %s14 = sadd.s32 1, %s10
    $region7: #{tpu_custom_call.1} parent=1 // loop_footer_branch
      %9 = sbr.rel target = $region3
    $region8: #{tpu_custom_call.1} parent=1 // loop_exit
      _

</llo_original>
